<compile_context>
chip_gen: v6e
topology: v6e:2x2x1
jax: 0.10.0
libtpu: 0.0.40
codegen_flags: <defaults>
</compile_context>

<pallas_src>
import functools

import jax
import jax.numpy as jnp
from jax.experimental import pallas as pl
from jax.experimental.pallas import tpu as pltpu


# ----------------------------------------------------------------------------
# One grid step = (image i, strip r of `th` output rows).
#   x_top/x_bot : [1, 1, W, C]   clamped halo row above / below the strip
#   x_mid       : [1, th, W, C]  the strip's own rows
#   w1          : [C, Cb] bf16   1x1 conv weight
#   w2p         : [3, Cb, 3*Co] bf16   3x3 conv weight, dx packed along N
#   s1,b1/s2,b2 : [1, C]/[1, Cb] f32   folded BN scale / bias
#   o_ref       : [1, th, W*Co] f32    lane-dense output slab
#   slab_ref    : [th+3, Wp, Cb] f32   zero-bordered activation slab (scratch)
# Slab layout per local row j (j=0 top halo, 1..th strip, th+1 bottom halo):
#   padded col 0 = left zero pad, cols 1..W = image cols, col W+1 = right pad
#   (cols >= W+2 and local row th+2 are never read).
# ----------------------------------------------------------------------------
def _dense_layer_kernel(x_top_ref, x_mid_ref, x_bot_ref, w1_ref, w2p_ref,
                        s1_ref, b1_ref, s2_ref, b2_ref, o_ref, slab_ref,
                        *, th, h, w, wp, nr):
    r = pl.program_id(1)
    c = x_mid_ref.shape[3]
    cb = w1_ref.shape[1]
    co = w2p_ref.shape[2] // 3
    cdt = w1_ref.dtype                     # bf16 compute dtype for the MXU

    s1 = s1_ref[...]; b1 = b1_ref[...]
    s2 = s2_ref[...]; b2 = b2_ref[...]
    w1 = w1_ref[...]

    def bottleneck(xp):                    # [P, C] f32 -> [P, Cb] f32
        a1 = jnp.maximum(xp * s1 + b1, 0.0)
        y1 = jnp.dot(a1.astype(cdt), w1, preferred_element_type=jnp.float32)
        return jnp.maximum(y1 * s2 + b2, 0.0)

    # ---- stage 1: BN1+ReLU -> 1x1 conv -> BN2+ReLU, written into the slab --
    a2_top = bottleneck(x_top_ref[0, 0])                       # [W, Cb]
    a2_mid = bottleneck(x_mid_ref[0].reshape(th * w, c))       # [th*W, Cb]
    a2_bot = bottleneck(x_bot_ref[0, 0])                       # [W, Cb]

    slab_ref[0:1, 1:w + 1, :] = a2_top.reshape(1, w, cb)
    slab_ref[1:th + 1, 1:w + 1, :] = a2_mid.reshape(th, w, cb)
    slab_ref[th + 1:th + 2, 1:w + 1, :] = a2_bot.reshape(1, w, cb)

    # conv2's zero padding: the two pad columns that are actually read.
    zcol = jnp.zeros((th + 3, 1, cb), jnp.float32)
    slab_ref[:, 0:1, :] = zcol
    slab_ref[:, w + 1:w + 2, :] = zcol

    # zero the halo / ragged rows that fall outside the image (targeted, not a
    # full-slab iota mask).
    zrow = jnp.zeros((1, w, cb), jnp.float32)

    @pl.when(r == 0)
    def _():
        slab_ref[0:1, 1:w + 1, :] = zrow

    for j in range(1, th + 2):
        if (nr - 1) * th + j - 1 >= h:     # this local row can ever be invalid
            @pl.when(r * th + j - 1 >= h)
            def _(j=j):
                slab_ref[j:j + 1, 1:w + 1, :] = zrow

    # ---- stage 2: 3x3 conv, dx-packed taps -----------------------------------
    # acc[p, dx*Co + c] = sum_dy slab_flat[dy*Wp + p] @ w2[dy, dx];
    # out_flat[f]      = acc[f, 0:Co] + acc[f+1, Co:2Co] + acc[f+2, 2Co:3Co].
    m2 = th * wp + 8
    acc = jnp.zeros((m2, 3 * co), jnp.float32)
    for dy in range(3):
        sl = slab_ref[dy:dy + th + 1].reshape((th + 1) * wp, cb)[:m2]
        acc = acc + jnp.dot(sl.astype(cdt), w2p_ref[dy],
                            preferred_element_type=jnp.float32)

    n_out = th * wp
    out = (acc[0:n_out, 0:co]
           + acc[1:1 + n_out, co:2 * co]
           + acc[2:2 + n_out, 2 * co:3 * co])                  # [th*Wp, Co]

    # lane-dense store: [th, W*Co] (one relayout, then full-lane vst's).
    o_ref[0] = (out.reshape(th, wp, co)[:, :w, :]
                .reshape(th, w * co).astype(o_ref.dtype))


def _pick_tile_h(h, want):
    """Rows per strip: full H for small maps, else a multiple of 8 (ragged
    last strip is handled in-kernel, so no fallback towards th=1)."""
    want = max(1, int(want))
    if h <= max(want, 8):
        return h
    return max(8, (want // 8) * 8)


@functools.partial(jax.jit, static_argnames=("tile_h",))
def dense_layer_forward_nhwc(x_nhwc, params, *, tile_h=8):
    """Fused DenseLayer forward. x_nhwc: [N, H, W, C] f32 -> [N, H, W, gr].
    On v6e (128 MiB VMEM) tile_h can be raised (e.g. 16/28/56) for bigger
    strips; on v7x keep it small enough for the 64 MiB VMEM."""
    w1 = params["w1"].astype(jnp.bfloat16)                    # [C, Cb]
    w2 = params["w2"]                                         # [3, 3, Cb, Co]
    cb = w1.shape[1]
    co = w2.shape[3]
    # pack the three dx taps of each dy along the matmul N dimension
    w2p = jnp.transpose(w2, (0, 2, 1, 3)).reshape(3, cb, 3 * co)
    w2p = w2p.astype(jnp.bfloat16)
    s1, b1, s2, b2 = params["s1"], params["b1"], params["s2"], params["b2"]

    n, h, w, c = x_nhwc.shape
    th = _pick_tile_h(h, tile_h)                              # rows per strip
    nr = -(-h // th)                                          # strips per image
    wp = ((w + 2 + 7) // 8) * 8                               # padded row stride

    # explicit VMEM budget (review: v7x = 64 MiB physical / 32 MiB scoped dflt)
    est = (2 * 4 * ((th + 2) * w * c + th * w * co)           # x / out blocks, 2x buffered
           + 2 * (c * cb + 9 * cb * co) + 8 * (c + cb)        # weights + BN vectors
           + 4 * (th + 3) * wp * cb                           # activation slab
           + 4 * 4 * (th * wp + 8) * 3 * co)                  # acc / temporaries
    vmem_limit = int(min(max(4 * est, 32 << 20), 100 << 20))

    kernel = functools.partial(_dense_layer_kernel, th=th, h=h, w=w, wp=wp,
                               nr=nr)
    out = pl.pallas_call(
        kernel,
        out_shape=jax.ShapeDtypeStruct((n, h, w * co), jnp.float32),
        grid=(n, nr),
        in_specs=[
            # clamped halo row above the strip
            pl.BlockSpec((1, 1, w, c),
                         lambda i, r: (i, jnp.maximum(r * th - 1, 0), 0, 0)),
            # the strip's own rows
            pl.BlockSpec((1, th, w, c), lambda i, r: (i, r, 0, 0)),
            # clamped halo row below the strip
            pl.BlockSpec((1, 1, w, c),
                         lambda i, r: (i, jnp.minimum(r * th + th, h - 1), 0, 0)),
            pl.BlockSpec((c, cb), lambda i, r: (0, 0)),
            pl.BlockSpec((3, cb, 3 * co), lambda i, r: (0, 0, 0)),
            pl.BlockSpec((1, c), lambda i, r: (0, 0)),
            pl.BlockSpec((1, c), lambda i, r: (0, 0)),
            pl.BlockSpec((1, cb), lambda i, r: (0, 0)),
            pl.BlockSpec((1, cb), lambda i, r: (0, 0)),
        ],
        out_specs=pl.BlockSpec((1, th, w * co), lambda i, r: (i, r, 0)),
        scratch_shapes=[pltpu.VMEM((th + 3, wp, cb), jnp.float32)],
        compiler_params=pltpu.CompilerParams(
            dimension_semantics=("parallel", "parallel"),
            vmem_limit_bytes=vmem_limit),
    )(x_nhwc, x_nhwc, x_nhwc, w1, w2p, s1, b1, s2, b2)
    return out.reshape(n, h, w, co)


@functools.partial(jax.jit, static_argnames=("tile_h",))
def dense_layer_forward(x_nchw, params, *, tile_h=8):
    """NCHW wrapper matching the PyTorch module.  A DenseNet stack should use
    dense_layer_forward_nhwc directly to skip these two boundary transposes."""
    x_nhwc = jnp.transpose(x_nchw, (0, 2, 3, 1))
    out = dense_layer_forward_nhwc(x_nhwc, params, tile_h=tile_h)
    return jnp.transpose(out, (0, 3, 1, 2))


def make_params(key, int_numss, gr, bs, eps=1e-5):
    """Deterministic parameter init matching the module's shapes."""
    Cb = bs * gr
    keys = jax.random.split(key, 10)

    # conv weights (PyTorch: conv1 [Cb, C, 1, 1], conv2 [gr, Cb, 3, 3]),
    # stored transposed into matmul / HWIO layouts.
    w1 = jax.random.normal(keys[0], (int_numss, Cb), jnp.float32) * 0.1
    w2 = jax.random.normal(keys[1], (3, 3, Cb, gr), jnp.float32) * 0.1

    # BatchNormAct2d (inference): y = relu((x - mean) * gamma/sqrt(var+eps) + beta)
    g1 = 1.0 + 0.1 * jax.random.normal(keys[2], (int_numss,), jnp.float32)
    be1 = 0.1 * jax.random.normal(keys[3], (int_numss,), jnp.float32)
    m1 = 0.1 * jax.random.normal(keys[4], (int_numss,), jnp.float32)
    v1 = 1.0 + 0.1 * jnp.abs(jax.random.normal(keys[5], (int_numss,), jnp.float32))

    g2 = 1.0 + 0.1 * jax.random.normal(keys[6], (Cb,), jnp.float32)
    be2 = 0.1 * jax.random.normal(keys[7], (Cb,), jnp.float32)
    m2 = 0.1 * jax.random.normal(keys[8], (Cb,), jnp.float32)
    v2 = 1.0 + 0.1 * jnp.abs(jax.random.normal(keys[9], (Cb,), jnp.float32))

    s1 = (g1 / jnp.sqrt(v1 + eps)).reshape(1, int_numss)
    b1 = (be1 - m1 * g1 / jnp.sqrt(v1 + eps)).reshape(1, int_numss)
    s2 = (g2 / jnp.sqrt(v2 + eps)).reshape(1, Cb)
    b2 = (be2 - m2 * g2 / jnp.sqrt(v2 + eps)).reshape(1, Cb)

    return {"w1": w1, "w2": w2, "s1": s1, "b1": b1, "s2": s2, "b2": b2}


def _reference_forward(x_nchw, params):
    """Pure-JAX f32 reference of the module's forward (inference BN)."""
    s1 = params["s1"].reshape(1, -1, 1, 1)
    b1 = params["b1"].reshape(1, -1, 1, 1)
    s2 = params["s2"].reshape(1, -1, 1, 1)
    b2 = params["b2"].reshape(1, -1, 1, 1)
    h1 = jnp.maximum(x_nchw * s1 + b1, 0.0)
    bott = jnp.einsum("nchw,cd->ndhw", h1, params["w1"])
    h2 = jnp.maximum(bott * s2 + b2, 0.0)
    return jax.lax.conv_general_dilated(
        h2, params["w2"], window_strides=(1, 1), padding=((1, 1), (1, 1)),
        dimension_numbers=("NCHW", "HWIO", "NCHW"))


if __name__ == "__main__":
    # Small shapes: int_numss=4, gr=8, bs=4 -> bottleneck channels = 32.
    N, C, H, W = 2, 4, 16, 16
    gr, bs = 8, 4

    key = jax.random.PRNGKey(0)
    k_x, k_p = jax.random.split(key)
    x = jax.random.normal(k_x, (N, C, H, W), jnp.float32)
    params = make_params(k_p, C, gr, bs)

    # TODO(synk): dropout skipped — drop_rate defaults to 0.0 in the module.
    out = dense_layer_forward(x, params)
    jax.block_until_ready(out)
    assert out.shape == (N, gr, H, W), out.shape

    # bf16 MXU operands vs f32 PyTorch math -> tolerance check, not exact.
    ref = _reference_forward(x, params)
    err = float(jnp.max(jnp.abs(out - ref)))
    assert err < 5e-2, f"max abs err {err}"
    print("KERNEL_OK")
</pallas_src>

<mosaic_0001>
module attributes {stable_mosaic.version = 11 : i64} {
  func.func @_dense_layer_kernel(%arg0: i32, %arg1: i32, %arg2: memref<1x1x16x4xf32, #tpu.memory_space<vmem>>, %arg3: memref<1x8x16x4xf32, #tpu.memory_space<vmem>>, %arg4: memref<1x1x16x4xf32, #tpu.memory_space<vmem>>, %arg5: memref<4x32xbf16, #tpu.memory_space<vmem>>, %arg6: memref<3x32x24xbf16, #tpu.memory_space<vmem>>, %arg7: memref<1x4xf32, #tpu.memory_space<vmem>>, %arg8: memref<1x4xf32, #tpu.memory_space<vmem>>, %arg9: memref<1x32xf32, #tpu.memory_space<vmem>>, %arg10: memref<1x32xf32, #tpu.memory_space<vmem>>, %arg11: memref<1x8x128xf32, #tpu.memory_space<vmem>>, %arg12: memref<11x24x32xf32, #tpu.memory_space<vmem>>) attributes {dimension_semantics = [#tpu.dimension_semantics<parallel>, #tpu.dimension_semantics<parallel>], iteration_bounds = array<i64: 2, 2>, scalar_prefetch = 0 : i64, scratch_operands = 1 : i64, tpu.core_type = #tpu.core_type<tc>, window_params = [{transform_indices = @transform_0, window_bounds = array<i64: 1, 1, 16, 4>}, {transform_indices = @transform_1, window_bounds = array<i64: 1, 8, 16, 4>}, {transform_indices = @transform_2, window_bounds = array<i64: 1, 1, 16, 4>}, {pipeline_mode = #tpu.pipeline_mode<synchronous>, transform_indices = @transform_3, window_bounds = array<i64: 4, 32>}, {pipeline_mode = #tpu.pipeline_mode<synchronous>, transform_indices = @transform_4, window_bounds = array<i64: 3, 32, 24>}, {pipeline_mode = #tpu.pipeline_mode<synchronous>, transform_indices = @transform_5, window_bounds = array<i64: 1, 4>}, {pipeline_mode = #tpu.pipeline_mode<synchronous>, transform_indices = @transform_6, window_bounds = array<i64: 1, 4>}, {pipeline_mode = #tpu.pipeline_mode<synchronous>, transform_indices = @transform_7, window_bounds = array<i64: 1, 32>}, {pipeline_mode = #tpu.pipeline_mode<synchronous>, transform_indices = @transform_8, window_bounds = array<i64: 1, 32>}, {transform_indices = @transform_9, window_bounds = array<i64: 1, 8, 128>}]} {
    %c0 = arith.constant 0 : index
    %c0_0 = arith.constant 0 : index
    %0 = vector.load %arg7[%c0, %c0_0] : memref<1x4xf32, #tpu.memory_space<vmem>>, vector<1x4xf32>
    %c0_1 = arith.constant 0 : index
    %c0_2 = arith.constant 0 : index
    %1 = vector.load %arg8[%c0_1, %c0_2] : memref<1x4xf32, #tpu.memory_space<vmem>>, vector<1x4xf32>
    %c0_3 = arith.constant 0 : index
    %c0_4 = arith.constant 0 : index
    %2 = vector.load %arg9[%c0_3, %c0_4] : memref<1x32xf32, #tpu.memory_space<vmem>>, vector<1x32xf32>
    %c0_5 = arith.constant 0 : index
    %c0_6 = arith.constant 0 : index
    %3 = vector.load %arg10[%c0_5, %c0_6] : memref<1x32xf32, #tpu.memory_space<vmem>>, vector<1x32xf32>
    %c0_7 = arith.constant 0 : index
    %c0_8 = arith.constant 0 : index
    %4 = vector.load %arg5[%c0_7, %c0_8] : memref<4x32xbf16, #tpu.memory_space<vmem>>, vector<4x32xbf16>
    %c0_9 = arith.constant 0 : index
    %c0_10 = arith.constant 0 : index
    %c0_11 = arith.constant 0 : index
    %c0_12 = arith.constant 0 : index
    %5 = vector.load %arg2[%c0_9, %c0_10, %c0_11, %c0_12] : memref<1x1x16x4xf32, #tpu.memory_space<vmem>>, vector<1x1x16x4xf32>
    %6 = vector.shape_cast %5 : vector<1x1x16x4xf32> to vector<16x4xf32>
    %7 = vector.broadcast %0 : vector<1x4xf32> to vector<16x4xf32>
    %8 = arith.mulf %6, %7 : vector<16x4xf32>
    %9 = vector.broadcast %1 : vector<1x4xf32> to vector<16x4xf32>
    %10 = arith.addf %8, %9 : vector<16x4xf32>
    %cst = arith.constant 0.000000e+00 : f32
    %11 = vector.broadcast %cst : f32 to vector<16x4xf32>
    %12 = arith.maximumf %10, %11 : vector<16x4xf32>
    %13 = arith.truncf %12 : vector<16x4xf32> to vector<16x4xbf16>
    %cst_13 = arith.constant dense<0.000000e+00> : vector<16x32xf32>
    %14 = tpu.matmul %13, %4, %cst_13 {dimension_numbers = #tpu.dot_dimension_numbers<[1], [0], [0], [1], [0, 0, 1, 1], [], []>} : vector<16x4xbf16>, vector<4x32xbf16>, vector<16x32xf32> -> vector<16x32xf32>
    %15 = vector.broadcast %2 : vector<1x32xf32> to vector<16x32xf32>
    %16 = arith.mulf %14, %15 : vector<16x32xf32>
    %17 = vector.broadcast %3 : vector<1x32xf32> to vector<16x32xf32>
    %18 = arith.addf %16, %17 : vector<16x32xf32>
    %cst_14 = arith.constant 0.000000e+00 : f32
    %19 = vector.broadcast %cst_14 : f32 to vector<16x32xf32>
    %20 = arith.maximumf %18, %19 : vector<16x32xf32>
    %c0_15 = arith.constant 0 : index
    %c0_16 = arith.constant 0 : index
    %c0_17 = arith.constant 0 : index
    %c0_18 = arith.constant 0 : index
    %21 = vector.load %arg3[%c0_15, %c0_16, %c0_17, %c0_18] : memref<1x8x16x4xf32, #tpu.memory_space<vmem>>, vector<1x8x16x4xf32>
    %22 = vector.shape_cast %21 : vector<1x8x16x4xf32> to vector<8x16x4xf32>
    %23 = vector.shape_cast %22 : vector<8x16x4xf32> to vector<128x4xf32>
    %24 = vector.broadcast %0 : vector<1x4xf32> to vector<128x4xf32>
    %25 = arith.mulf %23, %24 : vector<128x4xf32>
    %26 = vector.broadcast %1 : vector<1x4xf32> to vector<128x4xf32>
    %27 = arith.addf %25, %26 : vector<128x4xf32>
    %cst_19 = arith.constant 0.000000e+00 : f32
    %28 = vector.broadcast %cst_19 : f32 to vector<128x4xf32>
    %29 = arith.maximumf %27, %28 : vector<128x4xf32>
    %30 = arith.truncf %29 : vector<128x4xf32> to vector<128x4xbf16>
    %cst_20 = arith.constant dense<0.000000e+00> : vector<128x32xf32>
    %31 = tpu.matmul %30, %4, %cst_20 {dimension_numbers = #tpu.dot_dimension_numbers<[1], [0], [0], [1], [0, 0, 1, 1], [], []>} : vector<128x4xbf16>, vector<4x32xbf16>, vector<128x32xf32> -> vector<128x32xf32>
    %32 = vector.broadcast %2 : vector<1x32xf32> to vector<128x32xf32>
    %33 = arith.mulf %31, %32 : vector<128x32xf32>
    %34 = vector.broadcast %3 : vector<1x32xf32> to vector<128x32xf32>
    %35 = arith.addf %33, %34 : vector<128x32xf32>
    %cst_21 = arith.constant 0.000000e+00 : f32
    %36 = vector.broadcast %cst_21 : f32 to vector<128x32xf32>
    %37 = arith.maximumf %35, %36 : vector<128x32xf32>
    %c0_22 = arith.constant 0 : index
    %c0_23 = arith.constant 0 : index
    %c0_24 = arith.constant 0 : index
    %c0_25 = arith.constant 0 : index
    %38 = vector.load %arg4[%c0_22, %c0_23, %c0_24, %c0_25] : memref<1x1x16x4xf32, #tpu.memory_space<vmem>>, vector<1x1x16x4xf32>
    %39 = vector.shape_cast %38 : vector<1x1x16x4xf32> to vector<16x4xf32>
    %40 = vector.broadcast %0 : vector<1x4xf32> to vector<16x4xf32>
    %41 = arith.mulf %39, %40 : vector<16x4xf32>
    %42 = vector.broadcast %1 : vector<1x4xf32> to vector<16x4xf32>
    %43 = arith.addf %41, %42 : vector<16x4xf32>
    %cst_26 = arith.constant 0.000000e+00 : f32
    %44 = vector.broadcast %cst_26 : f32 to vector<16x4xf32>
    %45 = arith.maximumf %43, %44 : vector<16x4xf32>
    %46 = arith.truncf %45 : vector<16x4xf32> to vector<16x4xbf16>
    %cst_27 = arith.constant dense<0.000000e+00> : vector<16x32xf32>
    %47 = tpu.matmul %46, %4, %cst_27 {dimension_numbers = #tpu.dot_dimension_numbers<[1], [0], [0], [1], [0, 0, 1, 1], [], []>} : vector<16x4xbf16>, vector<4x32xbf16>, vector<16x32xf32> -> vector<16x32xf32>
    %48 = vector.broadcast %2 : vector<1x32xf32> to vector<16x32xf32>
    %49 = arith.mulf %47, %48 : vector<16x32xf32>
    %50 = vector.broadcast %3 : vector<1x32xf32> to vector<16x32xf32>
    %51 = arith.addf %49, %50 : vector<16x32xf32>
    %cst_28 = arith.constant 0.000000e+00 : f32
    %52 = vector.broadcast %cst_28 : f32 to vector<16x32xf32>
    %53 = arith.maximumf %51, %52 : vector<16x32xf32>
    %54 = vector.shape_cast %20 : vector<16x32xf32> to vector<1x16x32xf32>
    %c0_29 = arith.constant 0 : index
    %c1 = arith.constant 1 : index
    %c0_30 = arith.constant 0 : index
    %55 = vector.load %arg12[%c0_29, %c1, %c0_30] : memref<11x24x32xf32, #tpu.memory_space<vmem>>, vector<1x16x32xf32>
    tpu.vector_store %arg12[%c0_29, %c1, %c0_30], %54 {strides = array<i32>} : memref<11x24x32xf32, #tpu.memory_space<vmem>>, vector<1x16x32xf32>,
    %56 = vector.shape_cast %37 : vector<128x32xf32> to vector<8x16x32xf32>
    %c1_31 = arith.constant 1 : index
    %c1_32 = arith.constant 1 : index
    %c0_33 = arith.constant 0 : index
    %57 = vector.load %arg12[%c1_31, %c1_32, %c0_33] : memref<11x24x32xf32, #tpu.memory_space<vmem>>, vector<8x16x32xf32>
    tpu.vector_store %arg12[%c1_31, %c1_32, %c0_33], %56 {strides = array<i32>} : memref<11x24x32xf32, #tpu.memory_space<vmem>>, vector<8x16x32xf32>,
    %58 = vector.shape_cast %53 : vector<16x32xf32> to vector<1x16x32xf32>
    %c9 = arith.constant 9 : index
    %c1_34 = arith.constant 1 : index
    %c0_35 = arith.constant 0 : index
    %59 = vector.load %arg12[%c9, %c1_34, %c0_35] : memref<11x24x32xf32, #tpu.memory_space<vmem>>, vector<1x16x32xf32>
    tpu.vector_store %arg12[%c9, %c1_34, %c0_35], %58 {strides = array<i32>} : memref<11x24x32xf32, #tpu.memory_space<vmem>>, vector<1x16x32xf32>,
    %cst_36 = arith.constant 0.000000e+00 : f32
    %60 = vector.broadcast %cst_36 : f32 to vector<11x1x32xf32>
    %c0_37 = arith.constant 0 : index
    %c0_38 = arith.constant 0 : index
    %c0_39 = arith.constant 0 : index
    %61 = vector.load %arg12[%c0_37, %c0_38, %c0_39] : memref<11x24x32xf32, #tpu.memory_space<vmem>>, vector<11x1x32xf32>
    tpu.vector_store %arg12[%c0_37, %c0_38, %c0_39], %60 {strides = array<i32>} : memref<11x24x32xf32, #tpu.memory_space<vmem>>, vector<11x1x32xf32>,
    %c0_40 = arith.constant 0 : index
    %c17 = arith.constant 17 : index
    %c0_41 = arith.constant 0 : index
    %62 = vector.load %arg12[%c0_40, %c17, %c0_41] : memref<11x24x32xf32, #tpu.memory_space<vmem>>, vector<11x1x32xf32>
    tpu.vector_store %arg12[%c0_40, %c17, %c0_41], %60 {strides = array<i32>} : memref<11x24x32xf32, #tpu.memory_space<vmem>>, vector<11x1x32xf32>,
    %cst_42 = arith.constant 0.000000e+00 : f32
    %63 = vector.broadcast %cst_42 : f32 to vector<1x16x32xf32>
    %c0_i32 = arith.constant 0 : i32
    %64 = arith.cmpi eq, %arg1, %c0_i32 : i32
    %65 = arith.extui %64 : i1 to i32
    %c0_i32_43 = arith.constant 0 : i32
    %66 = arith.cmpi ne, %65, %c0_i32_43 : i32
    scf.if %66 {
      %c0_69 = arith.constant 0 : index
      %c1_70 = arith.constant 1 : index
      %c0_71 = arith.constant 0 : index
      %109 = vector.load %arg12[%c0_69, %c1_70, %c0_71] : memref<11x24x32xf32, #tpu.memory_space<vmem>>, vector<1x16x32xf32>
      tpu.vector_store %arg12[%c0_69, %c1_70, %c0_71], %63 {strides = array<i32>} : memref<11x24x32xf32, #tpu.memory_space<vmem>>, vector<1x16x32xf32>,
    } else {
    }
    %c8_i32 = arith.constant 8 : i32
    %67 = arith.muli %arg1, %c8_i32 : i32
    %c9_i32 = arith.constant 9 : i32
    %68 = arith.addi %67, %c9_i32 : i32
    %c1_i32 = arith.constant 1 : i32
    %69 = arith.subi %68, %c1_i32 : i32
    %c16_i32 = arith.constant 16 : i32
    %70 = arith.cmpi sge, %69, %c16_i32 : i32
    %71 = arith.extui %70 : i1 to i32
    %c0_i32_44 = arith.constant 0 : i32
    %72 = arith.cmpi ne, %71, %c0_i32_44 : i32
    scf.if %72 {
      %c9_69 = arith.constant 9 : index
      %c1_70 = arith.constant 1 : index
      %c0_71 = arith.constant 0 : index
      %109 = vector.load %arg12[%c9_69, %c1_70, %c0_71] : memref<11x24x32xf32, #tpu.memory_space<vmem>>, vector<1x16x32xf32>
      tpu.vector_store %arg12[%c9_69, %c1_70, %c0_71], %63 {strides = array<i32>} : memref<11x24x32xf32, #tpu.memory_space<vmem>>, vector<1x16x32xf32>,
    } else {
    }
    %cst_45 = arith.constant 0.000000e+00 : f32
    %73 = vector.broadcast %cst_45 : f32 to vector<200x24xf32>
    %c0_46 = arith.constant 0 : index
    %c0_47 = arith.constant 0 : index
    %c0_48 = arith.constant 0 : index
    %74 = vector.load %arg12[%c0_46, %c0_47, %c0_48] : memref<11x24x32xf32, #tpu.memory_space<vmem>>, vector<9x24x32xf32>
    %75 = vector.shape_cast %74 : vector<9x24x32xf32> to vector<216x32xf32>
    %76 = vector.extract_strided_slice %75 {offsets = [0, 0], sizes = [200, 32], strides = [1, 1]} : vector<216x32xf32> to vector<200x32xf32>
    %77 = arith.truncf %76 : vector<200x32xf32> to vector<200x32xbf16>
    %c0_49 = arith.constant 0 : index
    %c0_50 = arith.constant 0 : index
    %c0_51 = arith.constant 0 : index
    %78 = vector.load %arg6[%c0_49, %c0_50, %c0_51] : memref<3x32x24xbf16, #tpu.memory_space<vmem>>, vector<1x32x24xbf16>
    %79 = vector.shape_cast %78 : vector<1x32x24xbf16> to vector<32x24xbf16>
    %cst_52 = arith.constant dense<0.000000e+00> : vector<200x24xf32>
    %80 = tpu.matmul %77, %79, %cst_52 {dimension_numbers = #tpu.dot_dimension_numbers<[1], [0], [0], [1], [0, 0, 1, 1], [], []>} : vector<200x32xbf16>, vector<32x24xbf16>, vector<200x24xf32> -> vector<200x24xf32>
    %81 = arith.addf %73, %80 : vector<200x24xf32>
    %c1_53 = arith.constant 1 : index
    %c0_54 = arith.constant 0 : index
    %c0_55 = arith.constant 0 : index
    %82 = vector.load %arg12[%c1_53, %c0_54, %c0_55] : memref<11x24x32xf32, #tpu.memory_space<vmem>>, vector<9x24x32xf32>
    %83 = vector.shape_cast %82 : vector<9x24x32xf32> to vector<216x32xf32>
    %84 = vector.extract_strided_slice %83 {offsets = [0, 0], sizes = [200, 32], strides = [1, 1]} : vector<216x32xf32> to vector<200x32xf32>
    %85 = arith.truncf %84 : vector<200x32xf32> to vector<200x32xbf16>
    %c1_56 = arith.constant 1 : index
    %c0_57 = arith.constant 0 : index
    %c0_58 = arith.constant 0 : index
    %86 = vector.load %arg6[%c1_56, %c0_57, %c0_58] : memref<3x32x24xbf16, #tpu.memory_space<vmem>>, vector<1x32x24xbf16>
    %87 = vector.shape_cast %86 : vector<1x32x24xbf16> to vector<32x24xbf16>
    %cst_59 = arith.constant dense<0.000000e+00> : vector<200x24xf32>
    %88 = tpu.matmul %85, %87, %cst_59 {dimension_numbers = #tpu.dot_dimension_numbers<[1], [0], [0], [1], [0, 0, 1, 1], [], []>} : vector<200x32xbf16>, vector<32x24xbf16>, vector<200x24xf32> -> vector<200x24xf32>
    %89 = arith.addf %81, %88 : vector<200x24xf32>
    %c2 = arith.constant 2 : index
    %c0_60 = arith.constant 0 : index
    %c0_61 = arith.constant 0 : index
    %90 = vector.load %arg12[%c2, %c0_60, %c0_61] : memref<11x24x32xf32, #tpu.memory_space<vmem>>, vector<9x24x32xf32>
    %91 = vector.shape_cast %90 : vector<9x24x32xf32> to vector<216x32xf32>
    %92 = vector.extract_strided_slice %91 {offsets = [0, 0], sizes = [200, 32], strides = [1, 1]} : vector<216x32xf32> to vector<200x32xf32>
    %93 = arith.truncf %92 : vector<200x32xf32> to vector<200x32xbf16>
    %c2_62 = arith.constant 2 : index
    %c0_63 = arith.constant 0 : index
    %c0_64 = arith.constant 0 : index
    %94 = vector.load %arg6[%c2_62, %c0_63, %c0_64] : memref<3x32x24xbf16, #tpu.memory_space<vmem>>, vector<1x32x24xbf16>
    %95 = vector.shape_cast %94 : vector<1x32x24xbf16> to vector<32x24xbf16>
    %cst_65 = arith.constant dense<0.000000e+00> : vector<200x24xf32>
    %96 = tpu.matmul %93, %95, %cst_65 {dimension_numbers = #tpu.dot_dimension_numbers<[1], [0], [0], [1], [0, 0, 1, 1], [], []>} : vector<200x32xbf16>, vector<32x24xbf16>, vector<200x24xf32> -> vector<200x24xf32>
    %97 = arith.addf %89, %96 : vector<200x24xf32>
    %98 = vector.extract_strided_slice %97 {offsets = [0, 0], sizes = [192, 8], strides = [1, 1]} : vector<200x24xf32> to vector<192x8xf32>
    %99 = vector.extract_strided_slice %97 {offsets = [1, 8], sizes = [192, 8], strides = [1, 1]} : vector<200x24xf32> to vector<192x8xf32>
    %100 = arith.addf %98, %99 : vector<192x8xf32>
    %101 = vector.extract_strided_slice %97 {offsets = [2, 16], sizes = [192, 8], strides = [1, 1]} : vector<200x24xf32> to vector<192x8xf32>
    %102 = arith.addf %100, %101 : vector<192x8xf32>
    %103 = vector.shape_cast %102 : vector<192x8xf32> to vector<8x24x8xf32>
    %104 = vector.extract_strided_slice %103 {offsets = [0, 0, 0], sizes = [8, 16, 8], strides = [1, 1, 1]} : vector<8x24x8xf32> to vector<8x16x8xf32>
    %105 = vector.shape_cast %104 : vector<8x16x8xf32> to vector<8x128xf32>
    %c0_66 = arith.constant 0 : index
    %c0_67 = arith.constant 0 : index
    %c0_68 = arith.constant 0 : index
    %106 = vector.load %arg11[%c0_66, %c0_67, %c0_68] : memref<1x8x128xf32, #tpu.memory_space<vmem>>, vector<1x8x128xf32>
    %107 = vector.shape_cast %106 : vector<1x8x128xf32> to vector<8x128xf32>
    %108 = vector.shape_cast %105 : vector<8x128xf32> to vector<1x8x128xf32>
    tpu.vector_store %arg11[%c0_66, %c0_67, %c0_68], %108 {strides = array<i32>} : memref<1x8x128xf32, #tpu.memory_space<vmem>>, vector<1x8x128xf32>,
    return
  }
  func.func @transform_0(%arg0: i32, %arg1: i32) -> (i32, i32, i32, i32) {
    %c8_i32 = arith.constant 8 : i32
    %0 = arith.muli %arg1, %c8_i32 : i32
    %c1_i32 = arith.constant 1 : i32
    %1 = arith.subi %0, %c1_i32 : i32
    %c0_i32 = arith.constant 0 : i32
    %2 = arith.maxsi %1, %c0_i32 : i32
    %c0_i32_0 = arith.constant 0 : i32
    %c0_i32_1 = arith.constant 0 : i32
    %c0_i32_2 = arith.constant 0 : i32
    return %arg0, %2, %c0_i32_0, %c0_i32_1 : i32, i32, i32, i32
  }
  func.func @transform_1(%arg0: i32, %arg1: i32) -> (i32, i32, i32, i32) {
    %c0_i32 = arith.constant 0 : i32
    %c0_i32_0 = arith.constant 0 : i32
    %c0_i32_1 = arith.constant 0 : i32
    return %arg0, %arg1, %c0_i32, %c0_i32_0 : i32, i32, i32, i32
  }
  func.func @transform_2(%arg0: i32, %arg1: i32) -> (i32, i32, i32, i32) {
    %c8_i32 = arith.constant 8 : i32
    %0 = arith.muli %arg1, %c8_i32 : i32
    %c8_i32_0 = arith.constant 8 : i32
    %1 = arith.addi %0, %c8_i32_0 : i32
    %c15_i32 = arith.constant 15 : i32
    %2 = arith.minsi %1, %c15_i32 : i32
    %c0_i32 = arith.constant 0 : i32
    %c0_i32_1 = arith.constant 0 : i32
    %c0_i32_2 = arith.constant 0 : i32
    return %arg0, %2, %c0_i32, %c0_i32_1 : i32, i32, i32, i32
  }
  func.func @transform_3(%arg0: i32, %arg1: i32) -> (i32, i32) {
    %c0_i32 = arith.constant 0 : i32
    %c0_i32_0 = arith.constant 0 : i32
    %c0_i32_1 = arith.constant 0 : i32
    return %c0_i32, %c0_i32_0 : i32, i32
  }
  func.func @transform_4(%arg0: i32, %arg1: i32) -> (i32, i32, i32) {
    %c0_i32 = arith.constant 0 : i32
    %c0_i32_0 = arith.constant 0 : i32
    %c0_i32_1 = arith.constant 0 : i32
    %c0_i32_2 = arith.constant 0 : i32
    return %c0_i32, %c0_i32_0, %c0_i32_1 : i32, i32, i32
  }
  func.func @transform_5(%arg0: i32, %arg1: i32) -> (i32, i32) {
    %c0_i32 = arith.constant 0 : i32
    %c0_i32_0 = arith.constant 0 : i32
    %c0_i32_1 = arith.constant 0 : i32
    return %c0_i32, %c0_i32_0 : i32, i32
  }
  func.func @transform_6(%arg0: i32, %arg1: i32) -> (i32, i32) {
    %c0_i32 = arith.constant 0 : i32
    %c0_i32_0 = arith.constant 0 : i32
    %c0_i32_1 = arith.constant 0 : i32
    return %c0_i32, %c0_i32_0 : i32, i32
  }
  func.func @transform_7(%arg0: i32, %arg1: i32) -> (i32, i32) {
    %c0_i32 = arith.constant 0 : i32
    %c0_i32_0 = arith.constant 0 : i32
    %c0_i32_1 = arith.constant 0 : i32
    return %c0_i32, %c0_i32_0 : i32, i32
  }
  func.func @transform_8(%arg0: i32, %arg1: i32) -> (i32, i32) {
    %c0_i32 = arith.constant 0 : i32
    %c0_i32_0 = arith.constant 0 : i32
    %c0_i32_1 = arith.constant 0 : i32
    return %c0_i32, %c0_i32_0 : i32, i32
  }
  func.func @transform_9(%arg0: i32, %arg1: i32) -> (i32, i32, i32) {
    %c0_i32 = arith.constant 0 : i32
    %c0_i32_0 = arith.constant 0 : i32
    return %arg0, %arg1, %c0_i32 : i32, i32, i32
  }
}

</mosaic_0001>

<llo_original>
// kernel: dense_layer_forward_nhwc.1
$region0: #{dense_layer_forward_nhwc.1}
  #allocation0 [shape = 'u32[]', space=smem, size = 0x4, offset = 0x4, fixed_abs, tag = 'smem constant byte address 0x4 - core index']
  #allocation1 [shape = 'u32[144,128]{1,0:T(1,128)}', space=vmem, size = 0x12000, scoped, tag = 'internal scratch']
  #allocation2 [shape = 'f32[11,24,32]{2,1,0:T(8,128)}', space=vmem, size = 0x21000, scoped, tag = 'scratch operand']
  %s0 = inlined_call_operand.vmem [shape: f32[2,16,16,4], index: 0, kind: input, shape index: {}, may-alias: {0,1,2}]
  %s1 = inlined_call_operand.vmem [shape: f32[2,16,16,4], index: 1, kind: input, shape index: {}, may-alias: {0,1,2}]
  %s2 = inlined_call_operand.vmem [shape: f32[2,16,16,4], index: 2, kind: input, shape index: {}, may-alias: {0,1,2}]
  %s3 = inlined_call_operand.vmem [shape: bf16[4,32], index: 3, kind: input, shape index: {}]
  %s4 = inlined_call_operand.vmem [shape: bf16[3,32,24], index: 4, kind: input, shape index: {}]
  %s5 = inlined_call_operand.vmem [shape: f32[1,4], index: 5, kind: input, shape index: {}]
  %s6 = inlined_call_operand.vmem [shape: f32[1,4], index: 6, kind: input, shape index: {}]
  %s7 = inlined_call_operand.vmem [shape: f32[1,32], index: 7, kind: input, shape index: {}]
  %s8 = inlined_call_operand.vmem [shape: f32[1,32], index: 8, kind: input, shape index: {}]
  %s9 = inlined_call_operand.vmem [shape: f32[2,16,128], index: 9, kind: output, shape index: {}]
  %s10 = sld [smem:[#allocation0]]
  $region77: #{dense_layer_forward_nhwc.1} parent=0
    _
  %s12 = ssub.s32 1, %s10
  %s13 = scalar_select 0, %s12, %s10
  loop: start=0, step=1, limit=6
  $region2: #{dense_layer_forward_nhwc.1} parent=0 // loop_pre_header
    _
  $region3: #{dense_layer_forward_nhwc.1} parent=0 // loop_header
    %s15 = sphi 0, %s19
    %p16 = scmp.ge.s32.totalorder %s15, 6
    %s22 = sphi 0, %s34
    %s23 = sphi 0, %s30
    %s24 = sphi 0, %s22
    %s25 = sphi 0, %s23
    %s26 = sphi 0, %s24
    %s27 = sphi 0, %s25
    %s47 = sphi 0, %s49
    %s50 = sphi 0, %s47
    %s51 = sphi 0, %s50
    %s67 = sphi 0, %s51
    %s75 = sphi 0, %s77
    %s78 = sphi 0, %s75
    %s79 = sphi 0, %s78
    %s95 = sphi 0, %s79
    %s111 = sphi 0, %s113
    %s114 = sphi 0, %s111
    %s115 = sphi 0, %s114
    %s131 = sphi 0, %s115
    %s135 = sphi 0, %s135
    %s137 = sphi 0, %s135
    %s138 = sphi 0, %s137
    %s152 = sphi 0, %s138
    %s156 = sphi 0, %s156
    %s158 = sphi 0, %s156
    %s159 = sphi 0, %s158
    %s173 = sphi 0, %s159
    %s177 = sphi 0, %s177
    %s179 = sphi 0, %s177
    %s180 = sphi 0, %s179
    %s194 = sphi 0, %s180
    %s198 = sphi 0, %s198
    %s200 = sphi 0, %s198
    %s201 = sphi 0, %s200
    %s215 = sphi 0, %s201
    %s219 = sphi 0, %s219
    %s221 = sphi 0, %s219
    %s222 = sphi 0, %s221
    %s236 = sphi 0, %s222
    %s240 = sphi 0, %s240
    %s242 = sphi 0, %s240
    %s243 = sphi 0, %s242
    %s257 = sphi 0, %s243
    %s265 = sphi 0, %s267
    %s268 = sphi 0, %s265
    %s269 = sphi 0, %s268
    %s285 = sphi 0, %s269
  $region4: #{dense_layer_forward_nhwc.1} parent=0 // loop_header_branch
    %18 = sbr.rel (%p16) target = $region8
  $region5: #{dense_layer_forward_nhwc.1} parent=0 // loop_body
    %s20 = ssub.s32 %s15, 1
    %s21 = ssub.s32 %s15, 2
    %s28 = sadd.s32 1, %s23
    %p29 = scmp.ge.s32.totalorder %s28, 2
    %s30 = scalar_select %p29, 0, %s28
    %s31 = sadd.s32 1, %s22
    %s32 = scalar_select %p29, %s31, %s22
    %p33 = scmp.ge.s32.totalorder %s32, 2
    %s34 = scalar_select %p33, 0, %s32
    %s35 = smul.u32 %s23, 8
    %s36 = ssub.s32 %s35, 1
    %p37 = scmp.gt.s32.totalorder %s36, 0
    %s38 = scalar_select %p37, %s36, 0
    %s39 = smul.u32 %s30, 8
    %s40 = ssub.s32 %s39, 1
    %p41 = scmp.gt.s32.totalorder %s40, 0
    %s42 = scalar_select %p41, %s40, 0
    %s43 = ssub.s32 %s22, %s34
    %s44 = ssub.s32 %s38, %s42
    %s45 = sor.u32 %s43, %s44
    %p46 = scmp.eq.s32.totalorder %s45, 0
    %s48 = sadd.s32 %s47, 1
    %s49 = scalar_select %p46, %s47, %s48
    %p52 = pneg %p46
    %p53 = scmp.eq.s32.totalorder %s15, 3
    %p54 = por %p52, %p53
    %p55 = scmp.ne.s32.totalorder %s47, %s50
    %p56 = scmp.eq.s32.totalorder %s15, 0
    %p57 = por %p55, %p56
    %p58 = scmp.ne.s32.totalorder %s47, %s50
    %p59 = scmp.eq.s32.totalorder %s20, 3
    %p60 = por %p58, %p59
    %p61 = scmp.ne.s32.totalorder %s50, %s51
    %p62 = scmp.eq.s32.totalorder %s20, 0
    %p63 = por %p61, %p62
    %p64 = scmp.ne.s32.totalorder %s50, %s51
    %p65 = scmp.eq.s32.totalorder %s21, 3
    %p66 = por %p64, %p65
    %p68 = scmp.ne.s32.totalorder %s51, %s67
    %p69 = scmp.eq.s32.totalorder %s21, 0
    %p70 = por %p68, %p69
    %s71 = ssub.s32 %s22, %s34
    %s72 = ssub.s32 %s23, %s30
    %s73 = sor.u32 %s71, %s72
    %p74 = scmp.eq.s32.totalorder %s73, 0
    %s76 = sadd.s32 %s75, 1
    %s77 = scalar_select %p74, %s75, %s76
    %p80 = pneg %p74
    %p81 = scmp.eq.s32.totalorder %s15, 3
    %p82 = por %p80, %p81
    %p83 = scmp.ne.s32.totalorder %s75, %s78
    %p84 = scmp.eq.s32.totalorder %s15, 0
    %p85 = por %p83, %p84
    %p86 = scmp.ne.s32.totalorder %s75, %s78
    %p87 = scmp.eq.s32.totalorder %s20, 3
    %p88 = por %p86, %p87
    %p89 = scmp.ne.s32.totalorder %s78, %s79
    %p90 = scmp.eq.s32.totalorder %s20, 0
    %p91 = por %p89, %p90
    %p92 = scmp.ne.s32.totalorder %s78, %s79
    %p93 = scmp.eq.s32.totalorder %s21, 3
    %p94 = por %p92, %p93
    %p96 = scmp.ne.s32.totalorder %s79, %s95
    %p97 = scmp.eq.s32.totalorder %s21, 0
    %p98 = por %p96, %p97
    %s99 = smul.u32 %s23, 8
    %s100 = sadd.s32 %s99, 8
    %p101 = scmp.lt.s32.totalorder %s100, 15
    %s102 = scalar_select %p101, %s100, 15
    %s103 = smul.u32 %s30, 8
    %s104 = sadd.s32 %s103, 8
    %p105 = scmp.lt.s32.totalorder %s104, 15
    %s106 = scalar_select %p105, %s104, 15
    %s107 = ssub.s32 %s22, %s34
    %s108 = ssub.s32 %s102, %s106
    %s109 = sor.u32 %s107, %s108
    %p110 = scmp.eq.s32.totalorder %s109, 0
    %s112 = sadd.s32 %s111, 1
    %s113 = scalar_select %p110, %s111, %s112
    %p116 = pneg %p110
    %p117 = scmp.eq.s32.totalorder %s15, 3
    %p118 = por %p116, %p117
    %p119 = scmp.ne.s32.totalorder %s111, %s114
    %p120 = scmp.eq.s32.totalorder %s15, 0
    %p121 = por %p119, %p120
    %p122 = scmp.ne.s32.totalorder %s111, %s114
    %p123 = scmp.eq.s32.totalorder %s20, 3
    %p124 = por %p122, %p123
    %p125 = scmp.ne.s32.totalorder %s114, %s115
    %p126 = scmp.eq.s32.totalorder %s20, 0
    %p127 = por %p125, %p126
    %p128 = scmp.ne.s32.totalorder %s114, %s115
    %p129 = scmp.eq.s32.totalorder %s21, 3
    %p130 = por %p128, %p129
    %p132 = scmp.ne.s32.totalorder %s115, %s131
    %p133 = scmp.eq.s32.totalorder %s21, 0
    %p134 = por %p132, %p133
    %s136 = sadd.s32 %s135, 1
    %p139 = scmp.eq.s32.totalorder %s15, 3
    %p140 = scmp.ne.s32.totalorder %s135, %s137
    %p141 = scmp.eq.s32.totalorder %s15, 0
    %p142 = por %p140, %p141
    %p143 = scmp.ne.s32.totalorder %s135, %s137
    %p144 = scmp.eq.s32.totalorder %s20, 3
    %p145 = por %p143, %p144
    %p146 = scmp.ne.s32.totalorder %s137, %s138
    %p147 = scmp.eq.s32.totalorder %s20, 0
    %p148 = por %p146, %p147
    %p149 = scmp.ne.s32.totalorder %s137, %s138
    %p150 = scmp.eq.s32.totalorder %s21, 3
    %p151 = por %p149, %p150
    %p153 = scmp.ne.s32.totalorder %s138, %s152
    %p154 = scmp.eq.s32.totalorder %s21, 0
    %p155 = por %p153, %p154
    %s157 = sadd.s32 %s156, 1
    %p160 = scmp.eq.s32.totalorder %s15, 3
    %p161 = scmp.ne.s32.totalorder %s156, %s158
    %p162 = scmp.eq.s32.totalorder %s15, 0
    %p163 = por %p161, %p162
    %p164 = scmp.ne.s32.totalorder %s156, %s158
    %p165 = scmp.eq.s32.totalorder %s20, 3
    %p166 = por %p164, %p165
    %p167 = scmp.ne.s32.totalorder %s158, %s159
    %p168 = scmp.eq.s32.totalorder %s20, 0
    %p169 = por %p167, %p168
    %p170 = scmp.ne.s32.totalorder %s158, %s159
    %p171 = scmp.eq.s32.totalorder %s21, 3
    %p172 = por %p170, %p171
    %p174 = scmp.ne.s32.totalorder %s159, %s173
    %p175 = scmp.eq.s32.totalorder %s21, 0
    %p176 = por %p174, %p175
    %s178 = sadd.s32 %s177, 1
    %p181 = scmp.eq.s32.totalorder %s15, 3
    %p182 = scmp.ne.s32.totalorder %s177, %s179
    %p183 = scmp.eq.s32.totalorder %s15, 0
    %p184 = por %p182, %p183
    %p185 = scmp.ne.s32.totalorder %s177, %s179
    %p186 = scmp.eq.s32.totalorder %s20, 3
    %p187 = por %p185, %p186
    %p188 = scmp.ne.s32.totalorder %s179, %s180
    %p189 = scmp.eq.s32.totalorder %s20, 0
    %p190 = por %p188, %p189
    %p191 = scmp.ne.s32.totalorder %s179, %s180
    %p192 = scmp.eq.s32.totalorder %s21, 3
    %p193 = por %p191, %p192
    %p195 = scmp.ne.s32.totalorder %s180, %s194
    %p196 = scmp.eq.s32.totalorder %s21, 0
    %p197 = por %p195, %p196
    %s199 = sadd.s32 %s198, 1
    %p202 = scmp.eq.s32.totalorder %s15, 3
    %p203 = scmp.ne.s32.totalorder %s198, %s200
    %p204 = scmp.eq.s32.totalorder %s15, 0
    %p205 = por %p203, %p204
    %p206 = scmp.ne.s32.totalorder %s198, %s200
    %p207 = scmp.eq.s32.totalorder %s20, 3
    %p208 = por %p206, %p207
    %p209 = scmp.ne.s32.totalorder %s200, %s201
    %p210 = scmp.eq.s32.totalorder %s20, 0
    %p211 = por %p209, %p210
    %p212 = scmp.ne.s32.totalorder %s200, %s201
    %p213 = scmp.eq.s32.totalorder %s21, 3
    %p214 = por %p212, %p213
    %p216 = scmp.ne.s32.totalorder %s201, %s215
    %p217 = scmp.eq.s32.totalorder %s21, 0
    %p218 = por %p216, %p217
    %s220 = sadd.s32 %s219, 1
    %p223 = scmp.eq.s32.totalorder %s15, 3
    %p224 = scmp.ne.s32.totalorder %s219, %s221
    %p225 = scmp.eq.s32.totalorder %s15, 0
    %p226 = por %p224, %p225
    %p227 = scmp.ne.s32.totalorder %s219, %s221
    %p228 = scmp.eq.s32.totalorder %s20, 3
    %p229 = por %p227, %p228
    %p230 = scmp.ne.s32.totalorder %s221, %s222
    %p231 = scmp.eq.s32.totalorder %s20, 0
    %p232 = por %p230, %p231
    %p233 = scmp.ne.s32.totalorder %s221, %s222
    %p234 = scmp.eq.s32.totalorder %s21, 3
    %p235 = por %p233, %p234
    %p237 = scmp.ne.s32.totalorder %s222, %s236
    %p238 = scmp.eq.s32.totalorder %s21, 0
    %p239 = por %p237, %p238
    %s241 = sadd.s32 %s240, 1
    %p244 = scmp.eq.s32.totalorder %s15, 3
    %p245 = scmp.ne.s32.totalorder %s240, %s242
    %p246 = scmp.eq.s32.totalorder %s15, 0
    %p247 = por %p245, %p246
    %p248 = scmp.ne.s32.totalorder %s240, %s242
    %p249 = scmp.eq.s32.totalorder %s20, 3
    %p250 = por %p248, %p249
    %p251 = scmp.ne.s32.totalorder %s242, %s243
    %p252 = scmp.eq.s32.totalorder %s20, 0
    %p253 = por %p251, %p252
    %p254 = scmp.ne.s32.totalorder %s242, %s243
    %p255 = scmp.eq.s32.totalorder %s21, 3
    %p256 = por %p254, %p255
    %p258 = scmp.ne.s32.totalorder %s243, %s257
    %p259 = scmp.eq.s32.totalorder %s21, 0
    %p260 = por %p258, %p259
    %s261 = ssub.s32 %s22, %s34
    %s262 = ssub.s32 %s23, %s30
    %s263 = sor.u32 %s261, %s262
    %p264 = scmp.eq.s32.totalorder %s263, 0
    %s266 = sadd.s32 %s265, 1
    %s267 = scalar_select %p264, %s265, %s266
    %p270 = pneg %p264
    %p271 = scmp.eq.s32.totalorder %s15, 3
    %p272 = por %p270, %p271
    %p273 = scmp.ne.s32.totalorder %s265, %s268
    %p274 = scmp.eq.s32.totalorder %s15, 0
    %p275 = por %p273, %p274
    %p276 = scmp.ne.s32.totalorder %s265, %s268
    %p277 = scmp.eq.s32.totalorder %s20, 3
    %p278 = por %p276, %p277
    %p279 = scmp.ne.s32.totalorder %s268, %s269
    %p280 = scmp.eq.s32.totalorder %s20, 0
    %p281 = por %p279, %p280
    %p282 = scmp.ne.s32.totalorder %s268, %s269
    %p283 = scmp.eq.s32.totalorder %s21, 3
    %p284 = por %p282, %p283
    %p286 = scmp.ne.s32.totalorder %s269, %s285
    %p287 = scmp.eq.s32.totalorder %s21, 0
    %p288 = por %p286, %p287
    %p289 = scmp.le.s32.totalorder 1, %s15
    %p290 = scmp.lt.s32.totalorder %s15, 5
    %p291 = pnand %p289, %p290
    %p292 = pneg %p291
    // Predicated region
    $region9: #{dense_layer_forward_nhwc.1} parent=5 // pred_check
      _
    $region10: #{dense_layer_forward_nhwc.1} parent=5 // pred_check_branch
      %294 = sbr.rel (%p291) target = $region12
    $region11: #{dense_layer_forward_nhwc.1} parent=5 // pred_region
      %s295 = ssub.s32 %s15, 1
      // Predicated region
      $region13: #{dense_layer_forward_nhwc.1} parent=11 // pred_check
        %p296 = pneg %p148
      $region14: #{dense_layer_forward_nhwc.1} parent=11 // pred_check_branch
        %298 = sbr.rel (%p296) target = $region16
      $region15: #{dense_layer_forward_nhwc.1} parent=11 // pred_region
        _
      $region16: #{dense_layer_forward_nhwc.1} parent=11 // pred_fallthru
        _
      // Predicated region
      $region17: #{dense_layer_forward_nhwc.1} parent=11 // pred_check
        %p299 = pneg %p169
      $region18: #{dense_layer_forward_nhwc.1} parent=11 // pred_check_branch
        %301 = sbr.rel (%p299) target = $region20
      $region19: #{dense_layer_forward_nhwc.1} parent=11 // pred_region
        _
      $region20: #{dense_layer_forward_nhwc.1} parent=11 // pred_fallthru
        _
      // Predicated region
      $region21: #{dense_layer_forward_nhwc.1} parent=11 // pred_check
        %p302 = pneg %p190
      $region22: #{dense_layer_forward_nhwc.1} parent=11 // pred_check_branch
        %304 = sbr.rel (%p302) target = $region24
      $region23: #{dense_layer_forward_nhwc.1} parent=11 // pred_region
        _
      $region24: #{dense_layer_forward_nhwc.1} parent=11 // pred_fallthru
        _
      // Predicated region
      $region25: #{dense_layer_forward_nhwc.1} parent=11 // pred_check
        %p305 = pneg %p211
      $region26: #{dense_layer_forward_nhwc.1} parent=11 // pred_check_branch
        %307 = sbr.rel (%p305) target = $region28
      $region27: #{dense_layer_forward_nhwc.1} parent=11 // pred_region
        _
      $region28: #{dense_layer_forward_nhwc.1} parent=11 // pred_fallthru
        _
      // Predicated region
      $region29: #{dense_layer_forward_nhwc.1} parent=11 // pred_check
        %p308 = pneg %p232
      $region30: #{dense_layer_forward_nhwc.1} parent=11 // pred_check_branch
        %310 = sbr.rel (%p308) target = $region32
      $region31: #{dense_layer_forward_nhwc.1} parent=11 // pred_region
        _
      $region32: #{dense_layer_forward_nhwc.1} parent=11 // pred_fallthru
        _
      // Predicated region
      $region33: #{dense_layer_forward_nhwc.1} parent=11 // pred_check
        %p311 = pneg %p253
      $region34: #{dense_layer_forward_nhwc.1} parent=11 // pred_check_branch
        %313 = sbr.rel (%p311) target = $region36
      $region35: #{dense_layer_forward_nhwc.1} parent=11 // pred_region
        _
      $region36: #{dense_layer_forward_nhwc.1} parent=11 // pred_fallthru
        _
    $region12: #{dense_layer_forward_nhwc.1} parent=5 // pred_fallthru
      _
    %p314 = scmp.lt.s32.totalorder %s15, 4
    // Predicated region
    $region37: #{dense_layer_forward_nhwc.1} parent=5 // pred_check
      %p315 = pneg %p314
    $region38: #{dense_layer_forward_nhwc.1} parent=5 // pred_check_branch
      %317 = sbr.rel (%p315) target = $region40
    $region39: #{dense_layer_forward_nhwc.1} parent=5 // pred_region
      // Predicated region
      $region41: #{dense_layer_forward_nhwc.1} parent=39 // pred_check
        %p318 = pneg %p57
      $region42: #{dense_layer_forward_nhwc.1} parent=39 // pred_check_branch
        %320 = sbr.rel (%p318) target = $region44
      $region43: #{dense_layer_forward_nhwc.1} parent=39 // pred_region
        %s321 = smul.u32 %s23, 8
        %s322 = ssub.s32 %s321, 1
        %p323 = scmp.gt.s32.totalorder %s322, 0
        %s324 = scalar_select %p323, %s322, 0
        %p325 = scmp.lt.s32.totalorder %s22, 1
        %s326 = scalar_select %p325, %s22, 1
        %p327 = scmp.lt.s32.totalorder %s324, 15
        %s328 = scalar_select %p327, %s324, 15
        %s329 = smul.addr %s328, 2
        %s330 = smul.addr %s326, 32
        %s331 = sadd.s32 %s329, %s330
        %s332 = smul.addr %s331, 8
        %s333 = scalar_lea.vmem %s0, %s332
        %s334 = smul.u32 %s23, 8
        %s335 = ssub.s32 %s334, 1
        %p336 = scmp.gt.s32.totalorder %s335, 0
        %s337 = scalar_select %p336, %s335, 0
      $region44: #{dense_layer_forward_nhwc.1} parent=39 // pred_fallthru
        _
      // Predicated region
      $region45: #{dense_layer_forward_nhwc.1} parent=39 // pred_check
        %p338 = pneg %p85
      $region46: #{dense_layer_forward_nhwc.1} parent=39 // pred_check_branch
        %340 = sbr.rel (%p338) target = $region48
      $region47: #{dense_layer_forward_nhwc.1} parent=39 // pred_region
        %s341 = smul.u32 8, %s23
        %p342 = scmp.lt.s32.totalorder %s22, 1
        %s343 = scalar_select %p342, %s22, 1
        %p344 = scmp.lt.s32.totalorder %s341, 15
        %s345 = scalar_select %p344, %s341, 15
        %s346 = smul.addr %s345, 2
        %s347 = smul.addr %s343, 32
        %s348 = sadd.s32 %s346, %s347
        %s349 = smul.addr %s348, 8
        %s350 = scalar_lea.vmem %s1, %s349
        %s351 = smul.u32 8, %s23
      $region48: #{dense_layer_forward_nhwc.1} parent=39 // pred_fallthru
        _
      // Predicated region
      $region49: #{dense_layer_forward_nhwc.1} parent=39 // pred_check
        %p352 = pneg %p121
      $region50: #{dense_layer_forward_nhwc.1} parent=39 // pred_check_branch
        %354 = sbr.rel (%p352) target = $region52
      $region51: #{dense_layer_forward_nhwc.1} parent=39 // pred_region
        %s355 = smul.u32 %s23, 8
        %s356 = sadd.s32 %s355, 8
        %p357 = scmp.lt.s32.totalorder %s356, 15
        %s358 = scalar_select %p357, %s356, 15
        %p359 = scmp.lt.s32.totalorder %s22, 1
        %s360 = scalar_select %p359, %s22, 1
        %p361 = scmp.lt.s32.totalorder %s358, 15
        %s362 = scalar_select %p361, %s358, 15
        %s363 = smul.addr %s362, 2
        %s364 = smul.addr %s360, 32
        %s365 = sadd.s32 %s363, %s364
        %s366 = smul.addr %s365, 8
        %s367 = scalar_lea.vmem %s2, %s366
        %s368 = smul.u32 %s23, 8
        %s369 = sadd.s32 %s368, 8
        %p370 = scmp.lt.s32.totalorder %s369, 15
        %s371 = scalar_select %p370, %s369, 15
      $region52: #{dense_layer_forward_nhwc.1} parent=39 // pred_fallthru
        _
    $region40: #{dense_layer_forward_nhwc.1} parent=5 // pred_fallthru
      _
    %p372 = scmp.le.s32.totalorder 1, %s15
    %p373 = scmp.lt.s32.totalorder %s15, 5
    %p374 = pnand %p372, %p373
    %p375 = pneg %p374
    // Predicated region
    $region53: #{dense_layer_forward_nhwc.1} parent=5 // pred_check
      _
    $region54: #{dense_layer_forward_nhwc.1} parent=5 // pred_check_branch
      %377 = sbr.rel (%p374) target = $region56
    $region55: #{dense_layer_forward_nhwc.1} parent=5 // pred_region
      %s378 = ssub.s32 %s15, 1
      %s379 = smul.u32 %s25, 8
      %s380 = ssub.s32 %s379, 1
      %p381 = scmp.gt.s32.totalorder %s380, 0
      %s382 = scalar_select %p381, %s380, 0
      %p383 = scmp.lt.s32.totalorder %s24, 1
      %s384 = scalar_select %p383, %s24, 1
      %p385 = scmp.lt.s32.totalorder %s382, 15
      %s386 = scalar_select %p385, %s382, 15
      %s387 = smul.addr %s386, 2
      %s388 = smul.addr %s384, 32
      %s389 = sadd.s32 %s387, %s388
      %s390 = smul.addr %s389, 8
      %s391 = scalar_lea.vmem %s0, %s390
      %p392 = pneg %p63
      %p393 = pneg %p60
      %s394 = smul.u32 8, %s25
      %p395 = scmp.lt.s32.totalorder %s24, 1
      %s396 = scalar_select %p395, %s24, 1
      %p397 = scmp.lt.s32.totalorder %s394, 15
      %s398 = scalar_select %p397, %s394, 15
      %s399 = smul.addr %s398, 2
      %s400 = smul.addr %s396, 32
      %s401 = sadd.s32 %s399, %s400
      %s402 = smul.addr %s401, 8
      %s403 = scalar_lea.vmem %s1, %s402
      %p404 = pneg %p91
      %p405 = pneg %p88
      %s406 = smul.u32 %s25, 8
      %s407 = sadd.s32 %s406, 8
      %p408 = scmp.lt.s32.totalorder %s407, 15
      %s409 = scalar_select %p408, %s407, 15
      %p410 = scmp.lt.s32.totalorder %s24, 1
      %s411 = scalar_select %p410, %s24, 1
      %p412 = scmp.lt.s32.totalorder %s409, 15
      %s413 = scalar_select %p412, %s409, 15
      %s414 = smul.addr %s413, 2
      %s415 = smul.addr %s411, 32
      %s416 = sadd.s32 %s414, %s415
      %s417 = smul.addr %s416, 8
      %s418 = scalar_lea.vmem %s2, %s417
      %p419 = pneg %p127
      %p420 = pneg %p124
      %p421 = pneg %p148
      %p422 = pneg %p145
      %p423 = pneg %p169
      %p424 = pneg %p166
      %p425 = pneg %p190
      %p426 = pneg %p187
      %p427 = pneg %p211
      %p428 = pneg %p208
      %p429 = pneg %p232
      %p430 = pneg %p229
      %p431 = pneg %p253
      %p432 = pneg %p250
      %p433 = pneg %p281
      %p434 = pneg %p278
      %p435 = scmp.lt.s32.totalorder %s24, 1
      %s436 = scalar_select %p435, %s24, 1
      %p437 = scmp.lt.s32.totalorder %s25, 1
      %s438 = scalar_select %p437, %s25, 1
      %s439 = smul.addr %s436, 2
      %s440 = sadd.s32 %s438, %s439
      %s441 = smul.addr %s440, 8
      %s442 = scalar_lea.vmem %s9, %s441
      %s443 = smul.u32 %s25, 8
      %s444 = ssub.s32 %s443, 1
      %p445 = scmp.gt.s32.totalorder %s444, 0
      %s446 = scalar_select %p445, %s444, 0
      %p447 = scmp.lt.s32.totalorder %s24, 1
      %s448 = scalar_select %p447, %s24, 1
      %p449 = scmp.lt.s32.totalorder %s446, 15
      %s450 = scalar_select %p449, %s446, 15
      %s451 = smul.addr %s450, 2
      %s452 = smul.addr %s448, 32
      %s453 = sadd.s32 %s451, %s452
      %s454 = smul.addr %s453, 8
      %s455 = scalar_lea.vmem %s0, %s454
      %s456 = smul.u32 %s25, 8
      %s457 = ssub.s32 %s456, 1
      %p458 = scmp.gt.s32.totalorder %s457, 0
      %s459 = scalar_select %p458, %s457, 0
      %s460 = smul.u32 8, %s25
      %p461 = scmp.lt.s32.totalorder %s24, 1
      %s462 = scalar_select %p461, %s24, 1
      %p463 = scmp.lt.s32.totalorder %s460, 15
      %s464 = scalar_select %p463, %s460, 15
      %s465 = smul.addr %s464, 2
      %s466 = smul.addr %s462, 32
      %s467 = sadd.s32 %s465, %s466
      %s468 = smul.addr %s467, 8
      %s469 = scalar_lea.vmem %s1, %s468
      %s470 = smul.u32 8, %s25
      %s471 = smul.u32 %s25, 8
      %s472 = sadd.s32 %s471, 8
      %p473 = scmp.lt.s32.totalorder %s472, 15
      %s474 = scalar_select %p473, %s472, 15
      %p475 = scmp.lt.s32.totalorder %s24, 1
      %s476 = scalar_select %p475, %s24, 1
      %p477 = scmp.lt.s32.totalorder %s474, 15
      %s478 = scalar_select %p477, %s474, 15
      %s479 = smul.addr %s478, 2
      %s480 = smul.addr %s476, 32
      %s481 = sadd.s32 %s479, %s480
      %s482 = smul.addr %s481, 8
      %s483 = scalar_lea.vmem %s2, %s482
      %s484 = smul.u32 %s25, 8
      %s485 = sadd.s32 %s484, 8
      %p486 = scmp.lt.s32.totalorder %s485, 15
      %s487 = scalar_select %p486, %s485, 15
      %p488 = scmp.lt.s32.totalorder %s24, 1
      %s489 = scalar_select %p488, %s24, 1
      %p490 = scmp.lt.s32.totalorder %s25, 1
      %s491 = scalar_select %p490, %s25, 1
      %s492 = smul.addr %s489, 2
      %s493 = sadd.s32 %s491, %s492
      %s494 = smul.addr %s493, 8
      %s495 = scalar_lea.vmem %s9, %s494
      %v497 = vld [vmem:[%s5] sm:$0x1]
      %v498 = vld [vmem:[%s6] sm:$0x1]
      %v499 = vld [vmem:[%s7] sm:$0x1]
      %v500 = vld [vmem:[%s8] sm:$0x1]
      %v501 = vld [vmem:[%s3] sm:$0x3]
      %v502 = vld [vmem:[%s455] sm:$0xff]
      %v503 = vld [vmem:[%s455 + $0x8] sm:$0xff]
      %v505 = vlaneseq
      %v506 = vshrl.u32 %v505, 7
      %v507 = vsub.s32 0, %v506
      %v508 = vrot.slane %v497, %v507
      %v510 = vmul.f32 %v502, %v508
      %v511 = vmul.f32 %v503, %v508
      %v513 = vlaneseq
      %v514 = vshrl.u32 %v513, 7
      %v515 = vsub.s32 0, %v514
      %v516 = vrot.slane %v498, %v515
      %v518 = vadd.f32 %v510, %v516
      %v519 = vadd.f32 %v511, %v516
      %v520 = vmax.f32 %v518, 0.0
      %v521 = vmax.f32 %v519, 0.0
      %v522 = vpack.c.bf16 %v521, %v520
      %vm523 = vcmask 31744
      %v525 = vsel %vm523, %v522, 0
      %vm527 = vcmask 1041408
      %v529 = vsel %vm527, %v501, 0
      %531 = vmatprep.subr.bf16.mxu0 0
      %532 = vmatpush1.bf16.msra.mxu0 0
      %533 = vmatprep.subr.bf16.mxu0 0
      %534 = vmatpush1.bf16.msra.mxu0 0
      %535 = vmatprep.subr.bf16.mxu0 0
      %536 = vmatpush1.bf16.msra.mxu0 0
      %537 = vmatprep.subr.bf16.mxu0 0
      %538 = vmatpush1.bf16.msra.mxu0 0
      %539 = vmatprep.subr.bf16.mxu0 0
      %540 = vmatpush1.bf16.msra.mxu0 0
      %541 = vmatprep.subr.bf16.mxu0 0
      %542 = vmatpush1.bf16.msra.mxu0 0
      %543 = vmatprep.subr.bf16.mxu0 0
      %544 = vmatpush1.bf16.msra.mxu0 0
      %545 = vmatprep.subr.bf16.mxu0 0
      %546 = vmatpush1.bf16.msra.mxu0 %v529
      %547 = vmatprep.subr.bf16.mxu0 0
      %548 = vmatpush2.bf16.msra.mxu0 0
      %549 = vmatprep.subr.bf16.mxu0 0
      %550 = vmatpush2.bf16.msra.mxu0 0
      %551 = vmatprep.subr.bf16.mxu0 0
      %552 = vmatpush2.bf16.msra.mxu0 0
      %553 = vmatprep.subr.bf16.mxu0 0
      %554 = vmatpush2.bf16.msra.mxu0 0
      %555 = vmatprep.subr.bf16.mxu0 0
      %556 = vmatpush2.bf16.msra.mxu0 0
      %557 = vmatprep.subr.bf16.mxu0 0
      %558 = vmatpush2.bf16.msra.mxu0 0
      %559 = vmatprep.subr.bf16.mxu0 0
      %560 = vmatpush2.bf16.msra.mxu0 0
      %561 = vmatprep.subr.bf16.mxu0 0
      %562 = vmatpush2.bf16.msra.mxu0 0
      %563 = vmatprep.mubr.bf16.mxu0 0
      %564 = vmatmul.mubr.bf16.gmra.mxu0 %v525
      %v565 = vpop.f32.mrf.mxu0
      %v566 = vadd.f32 0.0, %v565
      %v567 = vpop.f32.mrf.mxu0
      %v568 = vpop.f32.mrf.mxu0
      %v569 = vadd.f32 0.0, %v568
      %v570 = vpop.f32.mrf.mxu0
      %571 = vdwg.mxu0
      %v573 = vlaneseq
      %v574 = vshrl.u32 %v573, 7
      %v575 = vsub.s32 0, %v574
      %v576 = vrot.slane %v499, %v575
      %v578 = vmul.f32 %v566, %v576
      %v579 = vmul.f32 %v569, %v576
      %v581 = vlaneseq
      %v582 = vshrl.u32 %v581, 7
      %v583 = vsub.s32 0, %v582
      %v584 = vrot.slane %v500, %v583
      %v586 = vadd.f32 %v578, %v584
      %v587 = vadd.f32 %v579, %v584
      %v588 = vmax.f32 %v586, 0.0
      %v589 = vmax.f32 %v587, 0.0
      %v590 = vld [vmem:[%s469] sm:$0xff]
      %v591 = vld [vmem:[%s469 + $0x8] sm:$0xff]
      %v592 = vld [vmem:[%s469 + $0x10] sm:$0xff]
      %v593 = vld [vmem:[%s469 + $0x18] sm:$0xff]
      %v594 = vld [vmem:[%s469 + $0x20] sm:$0xff]
      %v595 = vld [vmem:[%s469 + $0x28] sm:$0xff]
      %v596 = vld [vmem:[%s469 + $0x30] sm:$0xff]
      %v597 = vld [vmem:[%s469 + $0x38] sm:$0xff]
      %v598 = vld [vmem:[%s469 + $0x40] sm:$0xff]
      %v599 = vld [vmem:[%s469 + $0x48] sm:$0xff]
      %v600 = vld [vmem:[%s469 + $0x50] sm:$0xff]
      %v601 = vld [vmem:[%s469 + $0x58] sm:$0xff]
      %v602 = vld [vmem:[%s469 + $0x60] sm:$0xff]
      %v603 = vld [vmem:[%s469 + $0x68] sm:$0xff]
      %v604 = vld [vmem:[%s469 + $0x70] sm:$0xff]
      %v605 = vld [vmem:[%s469 + $0x78] sm:$0xff]
      %v606 = vmul.f32 %v590, %v508
      %v607 = vmul.f32 %v591, %v508
      %v608 = vmul.f32 %v592, %v508
      %v609 = vmul.f32 %v593, %v508
      %v610 = vmul.f32 %v594, %v508
      %v611 = vmul.f32 %v595, %v508
      %v612 = vmul.f32 %v596, %v508
      %v613 = vmul.f32 %v597, %v508
      %v614 = vmul.f32 %v598, %v508
      %v615 = vmul.f32 %v599, %v508
      %v616 = vmul.f32 %v600, %v508
      %v617 = vmul.f32 %v601, %v508
      %v618 = vmul.f32 %v602, %v508
      %v619 = vmul.f32 %v603, %v508
      %v620 = vmul.f32 %v604, %v508
      %v621 = vmul.f32 %v605, %v508
      %v622 = vadd.f32 %v606, %v516
      %v623 = vadd.f32 %v607, %v516
      %v624 = vadd.f32 %v608, %v516
      %v625 = vadd.f32 %v609, %v516
      %v626 = vadd.f32 %v610, %v516
      %v627 = vadd.f32 %v611, %v516
      %v628 = vadd.f32 %v612, %v516
      %v629 = vadd.f32 %v613, %v516
      %v630 = vadd.f32 %v614, %v516
      %v631 = vadd.f32 %v615, %v516
      %v632 = vadd.f32 %v616, %v516
      %v633 = vadd.f32 %v617, %v516
      %v634 = vadd.f32 %v618, %v516
      %v635 = vadd.f32 %v619, %v516
      %v636 = vadd.f32 %v620, %v516
      %v637 = vadd.f32 %v621, %v516
      %v638 = vmax.f32 %v622, 0.0
      %v639 = vmax.f32 %v623, 0.0
      %v640 = vmax.f32 %v624, 0.0
      %v641 = vmax.f32 %v625, 0.0
      %v642 = vmax.f32 %v626, 0.0
      %v643 = vmax.f32 %v627, 0.0
      %v644 = vmax.f32 %v628, 0.0
      %v645 = vmax.f32 %v629, 0.0
      %v646 = vmax.f32 %v630, 0.0
      %v647 = vmax.f32 %v631, 0.0
      %v648 = vmax.f32 %v632, 0.0
      %v649 = vmax.f32 %v633, 0.0
      %v650 = vmax.f32 %v634, 0.0
      %v651 = vmax.f32 %v635, 0.0
      %v652 = vmax.f32 %v636, 0.0
      %v653 = vmax.f32 %v637, 0.0
      %v654 = vpack.c.bf16 %v639, %v638
      %v655 = vpack.c.bf16 %v641, %v640
      %v656 = vpack.c.bf16 %v643, %v642
      %v657 = vpack.c.bf16 %v645, %v644
      %v658 = vpack.c.bf16 %v647, %v646
      %v659 = vpack.c.bf16 %v649, %v648
      %v660 = vpack.c.bf16 %v651, %v650
      %v661 = vpack.c.bf16 %v653, %v652
      %v663 = vsel %vm523, %v654, 0
      %v666 = vsel %vm523, %v655, 0
      %v669 = vsel %vm523, %v656, 0
      %v672 = vsel %vm523, %v657, 0
      %v675 = vsel %vm523, %v658, 0
      %v678 = vsel %vm523, %v659, 0
      %v681 = vsel %vm523, %v660, 0
      %v684 = vsel %vm523, %v661, 0
      %686 = vmatprep.subr.bf16.mxu0 0
      %687 = vmatpush1.bf16.msra.mxu0 0
      %688 = vmatprep.subr.bf16.mxu0 0
      %689 = vmatpush1.bf16.msra.mxu0 0
      %690 = vmatprep.subr.bf16.mxu0 0
      %691 = vmatpush1.bf16.msra.mxu0 0
      %692 = vmatprep.subr.bf16.mxu0 0
      %693 = vmatpush1.bf16.msra.mxu0 0
      %694 = vmatprep.subr.bf16.mxu0 0
      %695 = vmatpush1.bf16.msra.mxu0 0
      %696 = vmatprep.subr.bf16.mxu0 0
      %697 = vmatpush1.bf16.msra.mxu0 0
      %698 = vmatprep.subr.bf16.mxu0 0
      %699 = vmatpush1.bf16.msra.mxu0 0
      %700 = vmatprep.subr.bf16.mxu0 0
      %701 = vmatpush1.bf16.msra.mxu0 %v529
      %702 = vmatprep.subr.bf16.mxu0 0
      %703 = vmatpush2.bf16.msra.mxu0 0
      %704 = vmatprep.subr.bf16.mxu0 0
      %705 = vmatpush2.bf16.msra.mxu0 0
      %706 = vmatprep.subr.bf16.mxu0 0
      %707 = vmatpush2.bf16.msra.mxu0 0
      %708 = vmatprep.subr.bf16.mxu0 0
      %709 = vmatpush2.bf16.msra.mxu0 0
      %710 = vmatprep.subr.bf16.mxu0 0
      %711 = vmatpush2.bf16.msra.mxu0 0
      %712 = vmatprep.subr.bf16.mxu0 0
      %713 = vmatpush2.bf16.msra.mxu0 0
      %714 = vmatprep.subr.bf16.mxu0 0
      %715 = vmatpush2.bf16.msra.mxu0 0
      %716 = vmatprep.subr.bf16.mxu0 0
      %717 = vmatpush2.bf16.msra.mxu0 0
      %718 = vmatprep.mubr.bf16.mxu0 0
      %719 = vmatmul.mubr.bf16.gmra.mxu0 %v663
      %v720 = vpop.f32.mrf.mxu0
      %v721 = vadd.f32 0.0, %v720
      %v722 = vpop.f32.mrf.mxu0
      %v723 = vpop.f32.mrf.mxu0
      %v724 = vadd.f32 0.0, %v723
      %v725 = vpop.f32.mrf.mxu0
      %726 = vmatprep.mubr.bf16.mxu0 0
      %727 = vmatmul.mubr.bf16.gmra.mxu0 %v666
      %v728 = vpop.f32.mrf.mxu0
      %v729 = vadd.f32 0.0, %v728
      %v730 = vpop.f32.mrf.mxu0
      %v731 = vpop.f32.mrf.mxu0
      %v732 = vadd.f32 0.0, %v731
      %v733 = vpop.f32.mrf.mxu0
      %734 = vmatprep.mubr.bf16.mxu0 0
      %735 = vmatmul.mubr.bf16.gmra.mxu0 %v669
      %v736 = vpop.f32.mrf.mxu0
      %v737 = vadd.f32 0.0, %v736
      %v738 = vpop.f32.mrf.mxu0
      %v739 = vpop.f32.mrf.mxu0
      %v740 = vadd.f32 0.0, %v739
      %v741 = vpop.f32.mrf.mxu0
      %742 = vmatprep.mubr.bf16.mxu0 0
      %743 = vmatmul.mubr.bf16.gmra.mxu0 %v672
      %v744 = vpop.f32.mrf.mxu0
      %v745 = vadd.f32 0.0, %v744
      %v746 = vpop.f32.mrf.mxu0
      %v747 = vpop.f32.mrf.mxu0
      %v748 = vadd.f32 0.0, %v747
      %v749 = vpop.f32.mrf.mxu0
      %750 = vmatprep.mubr.bf16.mxu0 0
      %751 = vmatmul.mubr.bf16.gmra.mxu0 %v675
      %v752 = vpop.f32.mrf.mxu0
      %v753 = vadd.f32 0.0, %v752
      %v754 = vpop.f32.mrf.mxu0
      %v755 = vpop.f32.mrf.mxu0
      %v756 = vadd.f32 0.0, %v755
      %v757 = vpop.f32.mrf.mxu0
      %758 = vmatprep.mubr.bf16.mxu0 0
      %759 = vmatmul.mubr.bf16.gmra.mxu0 %v678
      %v760 = vpop.f32.mrf.mxu0
      %v761 = vadd.f32 0.0, %v760
      %v762 = vpop.f32.mrf.mxu0
      %v763 = vpop.f32.mrf.mxu0
      %v764 = vadd.f32 0.0, %v763
      %v765 = vpop.f32.mrf.mxu0
      %766 = vmatprep.mubr.bf16.mxu0 0
      %767 = vmatmul.mubr.bf16.gmra.mxu0 %v681
      %v768 = vpop.f32.mrf.mxu0
      %v769 = vadd.f32 0.0, %v768
      %v770 = vpop.f32.mrf.mxu0
      %v771 = vpop.f32.mrf.mxu0
      %v772 = vadd.f32 0.0, %v771
      %v773 = vpop.f32.mrf.mxu0
      %774 = vmatprep.mubr.bf16.mxu0 0
      %775 = vmatmul.mubr.bf16.gmra.mxu0 %v684
      %v776 = vpop.f32.mrf.mxu0
      %v777 = vadd.f32 0.0, %v776
      %v778 = vpop.f32.mrf.mxu0
      %v779 = vpop.f32.mrf.mxu0
      %v780 = vadd.f32 0.0, %v779
      %v781 = vpop.f32.mrf.mxu0
      %782 = vdwg.mxu0
      %v783 = vmul.f32 %v721, %v576
      %v784 = vmul.f32 %v724, %v576
      %v785 = vmul.f32 %v729, %v576
      %v786 = vmul.f32 %v732, %v576
      %v787 = vmul.f32 %v737, %v576
      %v788 = vmul.f32 %v740, %v576
      %v789 = vmul.f32 %v745, %v576
      %v790 = vmul.f32 %v748, %v576
      %v791 = vmul.f32 %v753, %v576
      %v792 = vmul.f32 %v756, %v576
      %v793 = vmul.f32 %v761, %v576
      %v794 = vmul.f32 %v764, %v576
      %v795 = vmul.f32 %v769, %v576
      %v796 = vmul.f32 %v772, %v576
      %v797 = vmul.f32 %v777, %v576
      %v798 = vmul.f32 %v780, %v576
      %v799 = vadd.f32 %v783, %v584
      %v800 = vadd.f32 %v784, %v584
      %v801 = vadd.f32 %v785, %v584
      %v802 = vadd.f32 %v786, %v584
      %v803 = vadd.f32 %v787, %v584
      %v804 = vadd.f32 %v788, %v584
      %v805 = vadd.f32 %v789, %v584
      %v806 = vadd.f32 %v790, %v584
      %v807 = vadd.f32 %v791, %v584
      %v808 = vadd.f32 %v792, %v584
      %v809 = vadd.f32 %v793, %v584
      %v810 = vadd.f32 %v794, %v584
      %v811 = vadd.f32 %v795, %v584
      %v812 = vadd.f32 %v796, %v584
      %v813 = vadd.f32 %v797, %v584
      %v814 = vadd.f32 %v798, %v584
      %v815 = vmax.f32 %v799, 0.0
      %v816 = vmax.f32 %v800, 0.0
      %v817 = vmax.f32 %v801, 0.0
      %v818 = vmax.f32 %v802, 0.0
      %v819 = vmax.f32 %v803, 0.0
      %v820 = vmax.f32 %v804, 0.0
      %v821 = vmax.f32 %v805, 0.0
      %v822 = vmax.f32 %v806, 0.0
      %v823 = vmax.f32 %v807, 0.0
      %v824 = vmax.f32 %v808, 0.0
      %v825 = vmax.f32 %v809, 0.0
      %v826 = vmax.f32 %v810, 0.0
      %v827 = vmax.f32 %v811, 0.0
      %v828 = vmax.f32 %v812, 0.0
      %v829 = vmax.f32 %v813, 0.0
      %v830 = vmax.f32 %v814, 0.0
      %v831 = vld [vmem:[%s483] sm:$0xff]
      %v832 = vld [vmem:[%s483 + $0x8] sm:$0xff]
      %v833 = vmul.f32 %v831, %v508
      %v834 = vmul.f32 %v832, %v508
      %v835 = vadd.f32 %v833, %v516
      %v836 = vadd.f32 %v834, %v516
      %v837 = vmax.f32 %v835, 0.0
      %v838 = vmax.f32 %v836, 0.0
      %v839 = vpack.c.bf16 %v838, %v837
      %v841 = vsel %vm523, %v839, 0
      %843 = vmatprep.subr.bf16.mxu0 0
      %844 = vmatpush1.bf16.msra.mxu0 0
      %845 = vmatprep.subr.bf16.mxu0 0
      %846 = vmatpush1.bf16.msra.mxu0 0
      %847 = vmatprep.subr.bf16.mxu0 0
      %848 = vmatpush1.bf16.msra.mxu0 0
      %849 = vmatprep.subr.bf16.mxu0 0
      %850 = vmatpush1.bf16.msra.mxu0 0
      %851 = vmatprep.subr.bf16.mxu0 0
      %852 = vmatpush1.bf16.msra.mxu0 0
      %853 = vmatprep.subr.bf16.mxu0 0
      %854 = vmatpush1.bf16.msra.mxu0 0
      %855 = vmatprep.subr.bf16.mxu0 0
      %856 = vmatpush1.bf16.msra.mxu0 0
      %857 = vmatprep.subr.bf16.mxu0 0
      %858 = vmatpush1.bf16.msra.mxu0 %v529
      %859 = vmatprep.subr.bf16.mxu0 0
      %860 = vmatpush2.bf16.msra.mxu0 0
      %861 = vmatprep.subr.bf16.mxu0 0
      %862 = vmatpush2.bf16.msra.mxu0 0
      %863 = vmatprep.subr.bf16.mxu0 0
      %864 = vmatpush2.bf16.msra.mxu0 0
      %865 = vmatprep.subr.bf16.mxu0 0
      %866 = vmatpush2.bf16.msra.mxu0 0
      %867 = vmatprep.subr.bf16.mxu0 0
      %868 = vmatpush2.bf16.msra.mxu0 0
      %869 = vmatprep.subr.bf16.mxu0 0
      %870 = vmatpush2.bf16.msra.mxu0 0
      %871 = vmatprep.subr.bf16.mxu0 0
      %872 = vmatpush2.bf16.msra.mxu0 0
      %873 = vmatprep.subr.bf16.mxu0 0
      %874 = vmatpush2.bf16.msra.mxu0 0
      %875 = vmatprep.mubr.bf16.mxu0 0
      %876 = vmatmul.mubr.bf16.gmra.mxu0 %v841
      %v877 = vpop.f32.mrf.mxu0
      %v878 = vadd.f32 0.0, %v877
      %v879 = vpop.f32.mrf.mxu0
      %v880 = vpop.f32.mrf.mxu0
      %v881 = vadd.f32 0.0, %v880
      %v882 = vpop.f32.mrf.mxu0
      %883 = vdwg.mxu0
      %v884 = vmul.f32 %v878, %v576
      %v885 = vmul.f32 %v881, %v576
      %v886 = vadd.f32 %v884, %v584
      %v887 = vadd.f32 %v885, %v584
      %v888 = vmax.f32 %v886, 0.0
      %v889 = vmax.f32 %v887, 0.0
      %vm890 = vcmask 261120
      %891 = vst.msk [vmem:[#allocation2 + $0x1] sm:$0xff] %vm890, %v588
      %892 = vst.msk [vmem:[#allocation2 + $0x9] sm:$0xff] %vm890, %v589
      %s893 = scalar_lea.vmem [#allocation2], 24
      %894 = vst.msk [vmem:[%s893 + $0x1] sm:$0xff] %vm890, %v815
      %895 = vst.msk [vmem:[%s893 + $0x9] sm:$0xff] %vm890, %v816
      %896 = vst.msk [vmem:[%s893 + $0x19] sm:$0xff] %vm890, %v817
      %897 = vst.msk [vmem:[%s893 + $0x21] sm:$0xff] %vm890, %v818
      %898 = vst.msk [vmem:[%s893 + $0x31] sm:$0xff] %vm890, %v819
      %899 = vst.msk [vmem:[%s893 + $0x39] sm:$0xff] %vm890, %v820
      %900 = vst.msk [vmem:[%s893 + $0x49] sm:$0xff] %vm890, %v821
      %901 = vst.msk [vmem:[%s893 + $0x51] sm:$0xff] %vm890, %v822
      %902 = vst.msk [vmem:[%s893 + $0x61] sm:$0xff] %vm890, %v823
      %903 = vst.msk [vmem:[%s893 + $0x69] sm:$0xff] %vm890, %v824
      %904 = vst.msk [vmem:[%s893 + $0x79] sm:$0xff] %vm890, %v825
      %905 = vst.msk [vmem:[%s893 + $0x81] sm:$0xff] %vm890, %v826
      %906 = vst.msk [vmem:[%s893 + $0x91] sm:$0xff] %vm890, %v827
      %907 = vst.msk [vmem:[%s893 + $0x99] sm:$0xff] %vm890, %v828
      %908 = vst.msk [vmem:[%s893 + $0xa9] sm:$0xff] %vm890, %v829
      %909 = vst.msk [vmem:[%s893 + $0xb1] sm:$0xff] %vm890, %v830
      %s910 = scalar_lea.vmem [#allocation2], 216
      %911 = vst.msk [vmem:[%s910 + $0x1] sm:$0xff] %vm890, %v888
      %912 = vst.msk [vmem:[%s910 + $0x9] sm:$0xff] %vm890, %v889
      %vm913 = vcmask 253952
      %914 = vst.msk [vmem:[#allocation2] sm:$0x1] %vm913, 0.0
      %915 = vst.msk [vmem:[#allocation2 + $0x18] sm:$0x1] %vm913, 0.0
      %916 = vst.msk [vmem:[#allocation2 + $0x30] sm:$0x1] %vm913, 0.0
      %917 = vst.msk [vmem:[#allocation2 + $0x48] sm:$0x1] %vm913, 0.0
      %918 = vst.msk [vmem:[#allocation2 + $0x60] sm:$0x1] %vm913, 0.0
      %919 = vst.msk [vmem:[#allocation2 + $0x78] sm:$0x1] %vm913, 0.0
      %920 = vst.msk [vmem:[#allocation2 + $0x90] sm:$0x1] %vm913, 0.0
      %921 = vst.msk [vmem:[#allocation2 + $0xa8] sm:$0x1] %vm913, 0.0
      %922 = vst.msk [vmem:[#allocation2 + $0xc0] sm:$0x1] %vm913, 0.0
      %923 = vst.msk [vmem:[#allocation2 + $0xd8] sm:$0x1] %vm913, 0.0
      %924 = vst.msk [vmem:[#allocation2 + $0xf0] sm:$0x1] %vm913, 0.0
      %925 = vst.msk [vmem:[#allocation2 + $0x11] sm:$0x1] %vm913, 0.0
      %926 = vst.msk [vmem:[#allocation2 + $0x29] sm:$0x1] %vm913, 0.0
      %927 = vst.msk [vmem:[#allocation2 + $0x41] sm:$0x1] %vm913, 0.0
      %928 = vst.msk [vmem:[#allocation2 + $0x59] sm:$0x1] %vm913, 0.0
      %929 = vst.msk [vmem:[#allocation2 + $0x71] sm:$0x1] %vm913, 0.0
      %930 = vst.msk [vmem:[#allocation2 + $0x89] sm:$0x1] %vm913, 0.0
      %931 = vst.msk [vmem:[#allocation2 + $0xa1] sm:$0x1] %vm913, 0.0
      %932 = vst.msk [vmem:[#allocation2 + $0xb9] sm:$0x1] %vm913, 0.0
      %933 = vst.msk [vmem:[#allocation2 + $0xd1] sm:$0x1] %vm913, 0.0
      %934 = vst.msk [vmem:[#allocation2 + $0xe9] sm:$0x1] %vm913, 0.0
      %935 = vst.msk [vmem:[#allocation2 + $0x101] sm:$0x1] %vm913, 0.0
      %p936 = scmp.eq.s32.totalorder %s25, 0
      // Predicated region
      $region57: #{dense_layer_forward_nhwc.1} parent=55 // pred_check
        %p937 = pneg %p936
      $region58: #{dense_layer_forward_nhwc.1} parent=55 // pred_check_branch
        %939 = sbr.rel (%p937) target = $region60
      $region59: #{dense_layer_forward_nhwc.1} parent=55 // pred_region
        %940 = vst.msk [vmem:[#allocation2 + $0x1] sm:$0xff] %vm890, 0.0
        %941 = vst.msk [vmem:[#allocation2 + $0x9] sm:$0xff] %vm890, 0.0
      $region60: #{dense_layer_forward_nhwc.1} parent=55 // pred_fallthru
        _
      %s942 = smul.u32 %s25, 8
      %s943 = sadd.s32 %s942, 8
      %p944 = scmp.ge.s32.totalorder %s943, 16
      // Predicated region
      $region61: #{dense_layer_forward_nhwc.1} parent=55 // pred_check
        %p945 = pneg %p944
      $region62: #{dense_layer_forward_nhwc.1} parent=55 // pred_check_branch
        %947 = sbr.rel (%p945) target = $region64
      $region63: #{dense_layer_forward_nhwc.1} parent=55 // pred_region
        %948 = vst.msk [vmem:[%s910 + $0x1] sm:$0xff] %vm890, 0.0
        %949 = vst.msk [vmem:[%s910 + $0x9] sm:$0xff] %vm890, 0.0
      $region64: #{dense_layer_forward_nhwc.1} parent=55 // pred_fallthru
        _
      %v950 = vld [vmem:[#allocation2] sm:$0xff]
      %v951 = vld [vmem:[#allocation2 + $0x8] sm:$0xff]
      %v952 = vld [vmem:[#allocation2 + $0x10] sm:$0xff]
      %v953 = vld [vmem:[#allocation2 + $0x18] sm:$0xff]
      %v954 = vld [vmem:[#allocation2 + $0x20] sm:$0xff]
      %v955 = vld [vmem:[#allocation2 + $0x28] sm:$0xff]
      %v956 = vld [vmem:[#allocation2 + $0x30] sm:$0xff]
      %v957 = vld [vmem:[#allocation2 + $0x38] sm:$0xff]
      %v958 = vld [vmem:[#allocation2 + $0x40] sm:$0xff]
      %v959 = vld [vmem:[#allocation2 + $0x48] sm:$0xff]
      %v960 = vld [vmem:[#allocation2 + $0x50] sm:$0xff]
      %v961 = vld [vmem:[#allocation2 + $0x58] sm:$0xff]
      %v962 = vld [vmem:[#allocation2 + $0x60] sm:$0xff]
      %v963 = vld [vmem:[#allocation2 + $0x68] sm:$0xff]
      %v964 = vld [vmem:[#allocation2 + $0x70] sm:$0xff]
      %v965 = vld [vmem:[#allocation2 + $0x78] sm:$0xff]
      %v966 = vld [vmem:[#allocation2 + $0x80] sm:$0xff]
      %v967 = vld [vmem:[#allocation2 + $0x88] sm:$0xff]
      %v968 = vld [vmem:[#allocation2 + $0x90] sm:$0xff]
      %v969 = vld [vmem:[#allocation2 + $0x98] sm:$0xff]
      %v970 = vld [vmem:[#allocation2 + $0xa0] sm:$0xff]
      %v971 = vld [vmem:[#allocation2 + $0xa8] sm:$0xff]
      %v972 = vld [vmem:[#allocation2 + $0xb0] sm:$0xff]
      %v973 = vld [vmem:[#allocation2 + $0xb8] sm:$0xff]
      %v974 = vld [vmem:[#allocation2 + $0xc0] sm:$0xff]
      %v975 = vpack.c.bf16 %v951, %v950
      %v976 = vpack.c.bf16 %v953, %v952
      %v977 = vpack.c.bf16 %v955, %v954
      %v978 = vpack.c.bf16 %v957, %v956
      %v979 = vpack.c.bf16 %v959, %v958
      %v980 = vpack.c.bf16 %v961, %v960
      %v981 = vpack.c.bf16 %v963, %v962
      %v982 = vpack.c.bf16 %v965, %v964
      %v983 = vpack.c.bf16 %v967, %v966
      %v984 = vpack.c.bf16 %v969, %v968
      %v985 = vpack.c.bf16 %v971, %v970
      %v986 = vpack.c.bf16 %v973, %v972
      %v987 = vpack.c.bf16 %v974, %v974
      %v988 = vld [vmem:[%s4] sm:$0xf]
      %v989 = vld [vmem:[%s4 + $0x4] sm:$0xf]
      %v990 = vld [vmem:[%s4 + $0x8] sm:$0xf]
      %v991 = vld [vmem:[%s4 + $0xc] sm:$0xf]
      %v992 = vld [vmem:[%s893] sm:$0xff]
      %v993 = vld [vmem:[%s893 + $0x8] sm:$0xff]
      %v994 = vld [vmem:[%s893 + $0x10] sm:$0xff]
      %v995 = vld [vmem:[%s893 + $0x18] sm:$0xff]
      %v996 = vld [vmem:[%s893 + $0x20] sm:$0xff]
      %v997 = vld [vmem:[%s893 + $0x28] sm:$0xff]
      %v998 = vld [vmem:[%s893 + $0x30] sm:$0xff]
      %v999 = vld [vmem:[%s893 + $0x38] sm:$0xff]
      %v1000 = vld [vmem:[%s893 + $0x40] sm:$0xff]
      %v1001 = vld [vmem:[%s893 + $0x48] sm:$0xff]
      %v1002 = vld [vmem:[%s893 + $0x50] sm:$0xff]
      %v1003 = vld [vmem:[%s893 + $0x58] sm:$0xff]
      %v1004 = vld [vmem:[%s893 + $0x60] sm:$0xff]
      %v1005 = vld [vmem:[%s893 + $0x68] sm:$0xff]
      %v1006 = vld [vmem:[%s893 + $0x70] sm:$0xff]
      %v1007 = vld [vmem:[%s893 + $0x78] sm:$0xff]
      %v1008 = vld [vmem:[%s893 + $0x80] sm:$0xff]
      %v1009 = vld [vmem:[%s893 + $0x88] sm:$0xff]
      %v1010 = vld [vmem:[%s893 + $0x90] sm:$0xff]
      %v1011 = vld [vmem:[%s893 + $0x98] sm:$0xff]
      %v1012 = vld [vmem:[%s893 + $0xa0] sm:$0xff]
      %v1013 = vld [vmem:[%s893 + $0xa8] sm:$0xff]
      %v1014 = vld [vmem:[%s893 + $0xb0] sm:$0xff]
      %v1015 = vld [vmem:[%s893 + $0xb8] sm:$0xff]
      %v1016 = vld [vmem:[%s893 + $0xc0] sm:$0xff]
      %v1017 = vpack.c.bf16 %v993, %v992
      %v1018 = vpack.c.bf16 %v995, %v994
      %v1019 = vpack.c.bf16 %v997, %v996
      %v1020 = vpack.c.bf16 %v999, %v998
      %v1021 = vpack.c.bf16 %v1001, %v1000
      %v1022 = vpack.c.bf16 %v1003, %v1002
      %v1023 = vpack.c.bf16 %v1005, %v1004
      %v1024 = vpack.c.bf16 %v1007, %v1006
      %v1025 = vpack.c.bf16 %v1009, %v1008
      %v1026 = vpack.c.bf16 %v1011, %v1010
      %v1027 = vpack.c.bf16 %v1013, %v1012
      %v1028 = vpack.c.bf16 %v1015, %v1014
      %v1029 = vpack.c.bf16 %v1016, %v1016
      %s1030 = scalar_lea.vmem %s4, 16
      %v1031 = vld [vmem:[%s1030] sm:$0xf]
      %v1032 = vld [vmem:[%s1030 + $0x4] sm:$0xf]
      %v1033 = vld [vmem:[%s1030 + $0x8] sm:$0xf]
      %v1034 = vld [vmem:[%s1030 + $0xc] sm:$0xf]
      %v1039 = vunpack.c.l.b16 %v1031
      %v1040 = vunpack.c.l.b16 %v1032
      %v1041 = vunpack.c.l.b16 %v1033
      %v1042 = vunpack.c.l.b16 %v1034
      %v1043 = vpack.c.b16 %v1040, %v1039
      %v1044 = vpack.c.b16 %v1042, %v1041
      %v1048 = vsel %vm890, %v1017, 0
      %v1051 = vsel %vm890, %v1018, 0
      %v1054 = vsel %vm890, %v1019, 0
      %v1057 = vsel %vm890, %v1020, 0
      %v1060 = vsel %vm890, %v1021, 0
      %v1063 = vsel %vm890, %v1022, 0
      %v1066 = vsel %vm890, %v1023, 0
      %v1069 = vsel %vm890, %v1024, 0
      %v1072 = vsel %vm890, %v1025, 0
      %v1075 = vsel %vm890, %v1026, 0
      %v1078 = vsel %vm890, %v1027, 0
      %v1081 = vsel %vm890, %v1028, 0
      %v1084 = vsel %vm890, %v1029, 0
      %1086 = vmatprep.subr.bf16.mxu0 0
      %1087 = vmatpush1.bf16.msra.mxu0 0
      %1088 = vmatprep.subr.bf16.mxu0 0
      %1089 = vmatpush1.bf16.msra.mxu0 0
      %1090 = vmatprep.subr.bf16.mxu0 0
      %1091 = vmatpush1.bf16.msra.mxu0 0
      %1092 = vmatprep.subr.bf16.mxu0 0
      %1093 = vmatpush1.bf16.msra.mxu0 0
      %1094 = vmatprep.subr.bf16.mxu0 0
      %1095 = vmatpush1.bf16.msra.mxu0 0
      %1096 = vmatprep.subr.bf16.mxu0 0
      %1097 = vmatpush1.bf16.msra.mxu0 0
      %1098 = vmatprep.subr.bf16.mxu0 0
      %1099 = vmatpush1.bf16.msra.mxu0 %v1044
      %1100 = vmatprep.subr.bf16.mxu0 0
      %1101 = vmatpush1.bf16.msra.mxu0 %v1043
      %1102 = vmatprep.subr.bf16.mxu0 0
      %1103 = vmatpush2.bf16.msra.mxu0 0
      %1104 = vmatprep.subr.bf16.mxu0 0
      %1105 = vmatpush2.bf16.msra.mxu0 0
      %1106 = vmatprep.subr.bf16.mxu0 0
      %1107 = vmatpush2.bf16.msra.mxu0 0
      %1108 = vmatprep.subr.bf16.mxu0 0
      %1109 = vmatpush2.bf16.msra.mxu0 0
      %1110 = vmatprep.subr.bf16.mxu0 0
      %1111 = vmatpush2.bf16.msra.mxu0 0
      %1112 = vmatprep.subr.bf16.mxu0 0
      %1113 = vmatpush2.bf16.msra.mxu0 0
      %1114 = vmatprep.subr.bf16.mxu0 0
      %1115 = vmatpush2.bf16.msra.mxu0 0
      %1116 = vmatprep.subr.bf16.mxu0 0
      %1117 = vmatpush2.bf16.msra.mxu0 0
      %1118 = vmatprep.mubr.bf16.mxu0 0
      %1119 = vmatmul.mubr.bf16.gmra.mxu0 %v1048
      %v1120 = vpop.f32.mrf.mxu0
      %v1121 = vadd.f32 0.0, %v1120
      %v1122 = vpop.f32.mrf.mxu0
      %v1123 = vpop.f32.mrf.mxu0
      %v1124 = vadd.f32 0.0, %v1123
      %v1125 = vpop.f32.mrf.mxu0
      %1126 = vmatprep.mubr.bf16.mxu0 0
      %1127 = vmatmul.mubr.bf16.gmra.mxu0 %v1051
      %v1128 = vpop.f32.mrf.mxu0
      %v1129 = vadd.f32 0.0, %v1128
      %v1130 = vpop.f32.mrf.mxu0
      %v1131 = vpop.f32.mrf.mxu0
      %v1132 = vadd.f32 0.0, %v1131
      %v1133 = vpop.f32.mrf.mxu0
      %1134 = vmatprep.mubr.bf16.mxu0 0
      %1135 = vmatmul.mubr.bf16.gmra.mxu0 %v1054
      %v1136 = vpop.f32.mrf.mxu0
      %v1137 = vadd.f32 0.0, %v1136
      %v1138 = vpop.f32.mrf.mxu0
      %v1139 = vpop.f32.mrf.mxu0
      %v1140 = vadd.f32 0.0, %v1139
      %v1141 = vpop.f32.mrf.mxu0
      %1142 = vmatprep.mubr.bf16.mxu0 0
      %1143 = vmatmul.mubr.bf16.gmra.mxu0 %v1057
      %v1144 = vpop.f32.mrf.mxu0
      %v1145 = vadd.f32 0.0, %v1144
      %v1146 = vpop.f32.mrf.mxu0
      %v1147 = vpop.f32.mrf.mxu0
      %v1148 = vadd.f32 0.0, %v1147
      %v1149 = vpop.f32.mrf.mxu0
      %1150 = vmatprep.mubr.bf16.mxu0 0
      %1151 = vmatmul.mubr.bf16.gmra.mxu0 %v1060
      %v1152 = vpop.f32.mrf.mxu0
      %v1153 = vadd.f32 0.0, %v1152
      %v1154 = vpop.f32.mrf.mxu0
      %v1155 = vpop.f32.mrf.mxu0
      %v1156 = vadd.f32 0.0, %v1155
      %v1157 = vpop.f32.mrf.mxu0
      %1158 = vmatprep.mubr.bf16.mxu0 0
      %1159 = vmatmul.mubr.bf16.gmra.mxu0 %v1063
      %v1160 = vpop.f32.mrf.mxu0
      %v1161 = vadd.f32 0.0, %v1160
      %v1162 = vpop.f32.mrf.mxu0
      %v1163 = vpop.f32.mrf.mxu0
      %v1164 = vadd.f32 0.0, %v1163
      %v1165 = vpop.f32.mrf.mxu0
      %1166 = vmatprep.mubr.bf16.mxu0 0
      %1167 = vmatmul.mubr.bf16.gmra.mxu0 %v1066
      %v1168 = vpop.f32.mrf.mxu0
      %v1169 = vadd.f32 0.0, %v1168
      %v1170 = vpop.f32.mrf.mxu0
      %v1171 = vpop.f32.mrf.mxu0
      %v1172 = vadd.f32 0.0, %v1171
      %v1173 = vpop.f32.mrf.mxu0
      %1174 = vmatprep.mubr.bf16.mxu0 0
      %1175 = vmatmul.mubr.bf16.gmra.mxu0 %v1069
      %v1176 = vpop.f32.mrf.mxu0
      %v1177 = vadd.f32 0.0, %v1176
      %v1178 = vpop.f32.mrf.mxu0
      %v1179 = vpop.f32.mrf.mxu0
      %v1180 = vadd.f32 0.0, %v1179
      %v1181 = vpop.f32.mrf.mxu0
      %1182 = vmatprep.mubr.bf16.mxu0 0
      %1183 = vmatmul.mubr.bf16.gmra.mxu0 %v1072
      %v1184 = vpop.f32.mrf.mxu0
      %v1185 = vadd.f32 0.0, %v1184
      %v1186 = vpop.f32.mrf.mxu0
      %v1187 = vpop.f32.mrf.mxu0
      %v1188 = vadd.f32 0.0, %v1187
      %v1189 = vpop.f32.mrf.mxu0
      %1190 = vmatprep.mubr.bf16.mxu0 0
      %1191 = vmatmul.mubr.bf16.gmra.mxu0 %v1075
      %v1192 = vpop.f32.mrf.mxu0
      %v1193 = vadd.f32 0.0, %v1192
      %v1194 = vpop.f32.mrf.mxu0
      %v1195 = vpop.f32.mrf.mxu0
      %v1196 = vadd.f32 0.0, %v1195
      %v1197 = vpop.f32.mrf.mxu0
      %1198 = vmatprep.mubr.bf16.mxu0 0
      %1199 = vmatmul.mubr.bf16.gmra.mxu0 %v1078
      %v1200 = vpop.f32.mrf.mxu0
      %v1201 = vadd.f32 0.0, %v1200
      %v1202 = vpop.f32.mrf.mxu0
      %v1203 = vpop.f32.mrf.mxu0
      %v1204 = vadd.f32 0.0, %v1203
      %v1205 = vpop.f32.mrf.mxu0
      %1206 = vmatprep.mubr.bf16.mxu0 0
      %1207 = vmatmul.mubr.bf16.gmra.mxu0 %v1081
      %v1208 = vpop.f32.mrf.mxu0
      %v1209 = vadd.f32 0.0, %v1208
      %v1210 = vpop.f32.mrf.mxu0
      %v1211 = vpop.f32.mrf.mxu0
      %v1212 = vadd.f32 0.0, %v1211
      %v1213 = vpop.f32.mrf.mxu0
      %1214 = vmatprep.mubr.bf16.mxu0 0
      %1215 = vmatmul.mubr.bf16.gmra.mxu0 %v1084
      %v1216 = vpop.f32.mrf.mxu0
      %v1217 = vpop.f32.mrf.mxu0
      %v1218 = vpop.f32.mrf.mxu0
      %v1219 = vpop.f32.mrf.mxu0
      %1220 = vdwg.mxu0
      %v1225 = vunpack.c.l.b16 %v988
      %v1226 = vunpack.c.l.b16 %v989
      %v1227 = vunpack.c.l.b16 %v990
      %v1228 = vunpack.c.l.b16 %v991
      %v1229 = vpack.c.b16 %v1226, %v1225
      %v1230 = vpack.c.b16 %v1228, %v1227
      %v1234 = vsel %vm890, %v975, 0
      %v1237 = vsel %vm890, %v976, 0
      %v1240 = vsel %vm890, %v977, 0
      %v1243 = vsel %vm890, %v978, 0
      %v1246 = vsel %vm890, %v979, 0
      %v1249 = vsel %vm890, %v980, 0
      %v1252 = vsel %vm890, %v981, 0
      %v1255 = vsel %vm890, %v982, 0
      %v1258 = vsel %vm890, %v983, 0
      %v1261 = vsel %vm890, %v984, 0
      %v1264 = vsel %vm890, %v985, 0
      %v1267 = vsel %vm890, %v986, 0
      %v1270 = vsel %vm890, %v987, 0
      %1272 = vmatprep.subr.bf16.mxu0 0
      %1273 = vmatpush1.bf16.msra.mxu0 0
      %1274 = vmatprep.subr.bf16.mxu0 0
      %1275 = vmatpush1.bf16.msra.mxu0 0
      %1276 = vmatprep.subr.bf16.mxu0 0
      %1277 = vmatpush1.bf16.msra.mxu0 0
      %1278 = vmatprep.subr.bf16.mxu0 0
      %1279 = vmatpush1.bf16.msra.mxu0 0
      %1280 = vmatprep.subr.bf16.mxu0 0
      %1281 = vmatpush1.bf16.msra.mxu0 0
      %1282 = vmatprep.subr.bf16.mxu0 0
      %1283 = vmatpush1.bf16.msra.mxu0 0
      %1284 = vmatprep.subr.bf16.mxu0 0
      %1285 = vmatpush1.bf16.msra.mxu0 %v1230
      %1286 = vmatprep.subr.bf16.mxu0 0
      %1287 = vmatpush1.bf16.msra.mxu0 %v1229
      %1288 = vmatprep.subr.bf16.mxu0 0
      %1289 = vmatpush2.bf16.msra.mxu0 0
      %1290 = vmatprep.subr.bf16.mxu0 0
      %1291 = vmatpush2.bf16.msra.mxu0 0
      %1292 = vmatprep.subr.bf16.mxu0 0
      %1293 = vmatpush2.bf16.msra.mxu0 0
      %1294 = vmatprep.subr.bf16.mxu0 0
      %1295 = vmatpush2.bf16.msra.mxu0 0
      %1296 = vmatprep.subr.bf16.mxu0 0
      %1297 = vmatpush2.bf16.msra.mxu0 0
      %1298 = vmatprep.subr.bf16.mxu0 0
      %1299 = vmatpush2.bf16.msra.mxu0 0
      %1300 = vmatprep.subr.bf16.mxu0 0
      %1301 = vmatpush2.bf16.msra.mxu0 0
      %1302 = vmatprep.subr.bf16.mxu0 0
      %1303 = vmatpush2.bf16.msra.mxu0 0
      %1304 = vmatprep.mubr.bf16.mxu0 0
      %1305 = vmatmul.mubr.bf16.gmra.mxu0 %v1234
      %v1306 = vpop.f32.mrf.mxu0
      %v1307 = vadd.f32 %v1121, %v1306
      %v1308 = vpop.f32.mrf.mxu0
      %v1309 = vpop.f32.mrf.mxu0
      %v1310 = vadd.f32 %v1124, %v1309
      %v1311 = vpop.f32.mrf.mxu0
      %1312 = vmatprep.mubr.bf16.mxu0 0
      %1313 = vmatmul.mubr.bf16.gmra.mxu0 %v1237
      %v1314 = vpop.f32.mrf.mxu0
      %v1315 = vadd.f32 %v1129, %v1314
      %v1316 = vpop.f32.mrf.mxu0
      %v1317 = vpop.f32.mrf.mxu0
      %v1318 = vadd.f32 %v1132, %v1317
      %v1319 = vpop.f32.mrf.mxu0
      %1320 = vmatprep.mubr.bf16.mxu0 0
      %1321 = vmatmul.mubr.bf16.gmra.mxu0 %v1240
      %v1322 = vpop.f32.mrf.mxu0
      %v1323 = vadd.f32 %v1137, %v1322
      %v1324 = vpop.f32.mrf.mxu0
      %v1325 = vpop.f32.mrf.mxu0
      %v1326 = vadd.f32 %v1140, %v1325
      %v1327 = vpop.f32.mrf.mxu0
      %1328 = vmatprep.mubr.bf16.mxu0 0
      %1329 = vmatmul.mubr.bf16.gmra.mxu0 %v1243
      %v1330 = vpop.f32.mrf.mxu0
      %v1331 = vadd.f32 %v1145, %v1330
      %v1332 = vpop.f32.mrf.mxu0
      %v1333 = vpop.f32.mrf.mxu0
      %v1334 = vadd.f32 %v1148, %v1333
      %v1335 = vpop.f32.mrf.mxu0
      %1336 = vmatprep.mubr.bf16.mxu0 0
      %1337 = vmatmul.mubr.bf16.gmra.mxu0 %v1246
      %v1338 = vpop.f32.mrf.mxu0
      %v1339 = vadd.f32 %v1153, %v1338
      %v1340 = vpop.f32.mrf.mxu0
      %v1341 = vpop.f32.mrf.mxu0
      %v1342 = vadd.f32 %v1156, %v1341
      %v1343 = vpop.f32.mrf.mxu0
      %1344 = vmatprep.mubr.bf16.mxu0 0
      %1345 = vmatmul.mubr.bf16.gmra.mxu0 %v1249
      %v1346 = vpop.f32.mrf.mxu0
      %v1347 = vadd.f32 %v1161, %v1346
      %v1348 = vpop.f32.mrf.mxu0
      %v1349 = vpop.f32.mrf.mxu0
      %v1350 = vadd.f32 %v1164, %v1349
      %v1351 = vpop.f32.mrf.mxu0
      %1352 = vmatprep.mubr.bf16.mxu0 0
      %1353 = vmatmul.mubr.bf16.gmra.mxu0 %v1252
      %v1354 = vpop.f32.mrf.mxu0
      %v1355 = vadd.f32 %v1169, %v1354
      %v1356 = vpop.f32.mrf.mxu0
      %v1357 = vpop.f32.mrf.mxu0
      %v1358 = vadd.f32 %v1172, %v1357
      %v1359 = vpop.f32.mrf.mxu0
      %1360 = vmatprep.mubr.bf16.mxu0 0
      %1361 = vmatmul.mubr.bf16.gmra.mxu0 %v1255
      %v1362 = vpop.f32.mrf.mxu0
      %v1363 = vadd.f32 %v1177, %v1362
      %v1364 = vpop.f32.mrf.mxu0
      %v1365 = vpop.f32.mrf.mxu0
      %v1366 = vadd.f32 %v1180, %v1365
      %v1367 = vpop.f32.mrf.mxu0
      %1368 = vmatprep.mubr.bf16.mxu0 0
      %1369 = vmatmul.mubr.bf16.gmra.mxu0 %v1258
      %v1370 = vpop.f32.mrf.mxu0
      %v1371 = vadd.f32 %v1185, %v1370
      %v1372 = vpop.f32.mrf.mxu0
      %v1373 = vpop.f32.mrf.mxu0
      %v1374 = vadd.f32 %v1188, %v1373
      %v1375 = vpop.f32.mrf.mxu0
      %1376 = vmatprep.mubr.bf16.mxu0 0
      %1377 = vmatmul.mubr.bf16.gmra.mxu0 %v1261
      %v1378 = vpop.f32.mrf.mxu0
      %v1379 = vadd.f32 %v1193, %v1378
      %v1380 = vpop.f32.mrf.mxu0
      %v1381 = vpop.f32.mrf.mxu0
      %v1382 = vadd.f32 %v1196, %v1381
      %v1383 = vpop.f32.mrf.mxu0
      %1384 = vmatprep.mubr.bf16.mxu0 0
      %1385 = vmatmul.mubr.bf16.gmra.mxu0 %v1264
      %v1386 = vpop.f32.mrf.mxu0
      %v1387 = vadd.f32 %v1201, %v1386
      %v1388 = vpop.f32.mrf.mxu0
      %v1389 = vpop.f32.mrf.mxu0
      %v1390 = vadd.f32 %v1204, %v1389
      %v1391 = vpop.f32.mrf.mxu0
      %1392 = vmatprep.mubr.bf16.mxu0 0
      %1393 = vmatmul.mubr.bf16.gmra.mxu0 %v1267
      %v1394 = vpop.f32.mrf.mxu0
      %v1395 = vadd.f32 %v1209, %v1394
      %v1396 = vpop.f32.mrf.mxu0
      %v1397 = vpop.f32.mrf.mxu0
      %v1398 = vadd.f32 %v1212, %v1397
      %v1399 = vpop.f32.mrf.mxu0
      %1400 = vmatprep.mubr.bf16.mxu0 0
      %1401 = vmatmul.mubr.bf16.gmra.mxu0 %v1270
      %v1402 = vpop.f32.mrf.mxu0
      %v1403 = vpop.f32.mrf.mxu0
      %v1404 = vpop.f32.mrf.mxu0
      %v1405 = vpop.f32.mrf.mxu0
      %1406 = vdwg.mxu0
      %s1407 = scalar_lea.vmem [#allocation2], 48
      %v1408 = vld [vmem:[%s1407] sm:$0xff]
      %v1409 = vld [vmem:[%s1407 + $0x8] sm:$0xff]
      %v1410 = vld [vmem:[%s1407 + $0x10] sm:$0xff]
      %v1411 = vld [vmem:[%s1407 + $0x18] sm:$0xff]
      %v1412 = vld [vmem:[%s1407 + $0x20] sm:$0xff]
      %v1413 = vld [vmem:[%s1407 + $0x28] sm:$0xff]
      %v1414 = vld [vmem:[%s1407 + $0x30] sm:$0xff]
      %v1415 = vld [vmem:[%s1407 + $0x38] sm:$0xff]
      %v1416 = vld [vmem:[%s1407 + $0x40] sm:$0xff]
      %v1417 = vld [vmem:[%s1407 + $0x48] sm:$0xff]
      %v1418 = vld [vmem:[%s1407 + $0x50] sm:$0xff]
      %v1419 = vld [vmem:[%s1407 + $0x58] sm:$0xff]
      %v1420 = vld [vmem:[%s1407 + $0x60] sm:$0xff]
      %v1421 = vld [vmem:[%s1407 + $0x68] sm:$0xff]
      %v1422 = vld [vmem:[%s1407 + $0x70] sm:$0xff]
      %v1423 = vld [vmem:[%s1407 + $0x78] sm:$0xff]
      %v1424 = vld [vmem:[%s1407 + $0x80] sm:$0xff]
      %v1425 = vld [vmem:[%s1407 + $0x88] sm:$0xff]
      %v1426 = vld [vmem:[%s1407 + $0x90] sm:$0xff]
      %v1427 = vld [vmem:[%s1407 + $0x98] sm:$0xff]
      %v1428 = vld [vmem:[%s1407 + $0xa0] sm:$0xff]
      %v1429 = vld [vmem:[%s1407 + $0xa8] sm:$0xff]
      %v1430 = vld [vmem:[%s1407 + $0xb0] sm:$0xff]
      %v1431 = vld [vmem:[%s1407 + $0xb8] sm:$0xff]
      %v1432 = vld [vmem:[%s1407 + $0xc0] sm:$0xff]
      %v1433 = vpack.c.bf16 %v1409, %v1408
      %v1434 = vpack.c.bf16 %v1411, %v1410
      %v1435 = vpack.c.bf16 %v1413, %v1412
      %v1436 = vpack.c.bf16 %v1415, %v1414
      %v1437 = vpack.c.bf16 %v1417, %v1416
      %v1438 = vpack.c.bf16 %v1419, %v1418
      %v1439 = vpack.c.bf16 %v1421, %v1420
      %v1440 = vpack.c.bf16 %v1423, %v1422
      %v1441 = vpack.c.bf16 %v1425, %v1424
      %v1442 = vpack.c.bf16 %v1427, %v1426
      %v1443 = vpack.c.bf16 %v1429, %v1428
      %v1444 = vpack.c.bf16 %v1431, %v1430
      %v1445 = vpack.c.bf16 %v1432, %v1432
      %s1446 = scalar_lea.vmem %s4, 32
      %v1447 = vld [vmem:[%s1446] sm:$0xf]
      %v1448 = vld [vmem:[%s1446 + $0x4] sm:$0xf]
      %v1449 = vld [vmem:[%s1446 + $0x8] sm:$0xf]
      %v1450 = vld [vmem:[%s1446 + $0xc] sm:$0xf]
      %v1455 = vunpack.c.l.b16 %v1447
      %v1456 = vunpack.c.l.b16 %v1448
      %v1457 = vunpack.c.l.b16 %v1449
      %v1458 = vunpack.c.l.b16 %v1450
      %v1459 = vpack.c.b16 %v1456, %v1455
      %v1460 = vpack.c.b16 %v1458, %v1457
      %v1464 = vsel %vm890, %v1433, 0
      %v1467 = vsel %vm890, %v1434, 0
      %v1470 = vsel %vm890, %v1435, 0
      %v1473 = vsel %vm890, %v1436, 0
      %v1476 = vsel %vm890, %v1437, 0
      %v1479 = vsel %vm890, %v1438, 0
      %v1482 = vsel %vm890, %v1439, 0
      %v1485 = vsel %vm890, %v1440, 0
      %v1488 = vsel %vm890, %v1441, 0
      %v1491 = vsel %vm890, %v1442, 0
      %v1494 = vsel %vm890, %v1443, 0
      %v1497 = vsel %vm890, %v1444, 0
      %v1500 = vsel %vm890, %v1445, 0
      %1502 = vmatprep.subr.bf16.mxu0 0
      %1503 = vmatpush1.bf16.msra.mxu0 0
      %1504 = vmatprep.subr.bf16.mxu0 0
      %1505 = vmatpush1.bf16.msra.mxu0 0
      %1506 = vmatprep.subr.bf16.mxu0 0
      %1507 = vmatpush1.bf16.msra.mxu0 0
      %1508 = vmatprep.subr.bf16.mxu0 0
      %1509 = vmatpush1.bf16.msra.mxu0 0
      %1510 = vmatprep.subr.bf16.mxu0 0
      %1511 = vmatpush1.bf16.msra.mxu0 0
      %1512 = vmatprep.subr.bf16.mxu0 0
      %1513 = vmatpush1.bf16.msra.mxu0 0
      %1514 = vmatprep.subr.bf16.mxu0 0
      %1515 = vmatpush1.bf16.msra.mxu0 %v1460
      %1516 = vmatprep.subr.bf16.mxu0 0
      %1517 = vmatpush1.bf16.msra.mxu0 %v1459
      %1518 = vmatprep.subr.bf16.mxu0 0
      %1519 = vmatpush2.bf16.msra.mxu0 0
      %1520 = vmatprep.subr.bf16.mxu0 0
      %1521 = vmatpush2.bf16.msra.mxu0 0
      %1522 = vmatprep.subr.bf16.mxu0 0
      %1523 = vmatpush2.bf16.msra.mxu0 0
      %1524 = vmatprep.subr.bf16.mxu0 0
      %1525 = vmatpush2.bf16.msra.mxu0 0
      %1526 = vmatprep.subr.bf16.mxu0 0
      %1527 = vmatpush2.bf16.msra.mxu0 0
      %1528 = vmatprep.subr.bf16.mxu0 0
      %1529 = vmatpush2.bf16.msra.mxu0 0
      %1530 = vmatprep.subr.bf16.mxu0 0
      %1531 = vmatpush2.bf16.msra.mxu0 0
      %1532 = vmatprep.subr.bf16.mxu0 0
      %1533 = vmatpush2.bf16.msra.mxu0 0
      %1534 = vmatprep.mubr.bf16.mxu0 0
      %1535 = vmatmul.mubr.bf16.gmra.mxu0 %v1464
      %v1536 = vpop.f32.mrf.mxu0
      %v1537 = vadd.f32 0.0, %v1536
      %v1538 = vpop.f32.mrf.mxu0
      %v1539 = vpop.f32.mrf.mxu0
      %v1540 = vadd.f32 0.0, %v1539
      %v1541 = vpop.f32.mrf.mxu0
      %1542 = vmatprep.mubr.bf16.mxu0 0
      %1543 = vmatmul.mubr.bf16.gmra.mxu0 %v1467
      %v1544 = vpop.f32.mrf.mxu0
      %v1545 = vadd.f32 0.0, %v1544
      %v1546 = vpop.f32.mrf.mxu0
      %v1547 = vpop.f32.mrf.mxu0
      %v1548 = vadd.f32 0.0, %v1547
      %v1549 = vpop.f32.mrf.mxu0
      %1550 = vmatprep.mubr.bf16.mxu0 0
      %1551 = vmatmul.mubr.bf16.gmra.mxu0 %v1470
      %v1552 = vpop.f32.mrf.mxu0
      %v1553 = vadd.f32 0.0, %v1552
      %v1554 = vpop.f32.mrf.mxu0
      %v1555 = vpop.f32.mrf.mxu0
      %v1556 = vadd.f32 0.0, %v1555
      %v1557 = vpop.f32.mrf.mxu0
      %1558 = vmatprep.mubr.bf16.mxu0 0
      %1559 = vmatmul.mubr.bf16.gmra.mxu0 %v1473
      %v1560 = vpop.f32.mrf.mxu0
      %v1561 = vadd.f32 0.0, %v1560
      %v1562 = vpop.f32.mrf.mxu0
      %v1563 = vpop.f32.mrf.mxu0
      %v1564 = vadd.f32 0.0, %v1563
      %v1565 = vpop.f32.mrf.mxu0
      %1566 = vmatprep.mubr.bf16.mxu0 0
      %1567 = vmatmul.mubr.bf16.gmra.mxu0 %v1476
      %v1568 = vpop.f32.mrf.mxu0
      %v1569 = vadd.f32 0.0, %v1568
      %v1570 = vpop.f32.mrf.mxu0
      %v1571 = vpop.f32.mrf.mxu0
      %v1572 = vadd.f32 0.0, %v1571
      %v1573 = vpop.f32.mrf.mxu0
      %1574 = vmatprep.mubr.bf16.mxu0 0
      %1575 = vmatmul.mubr.bf16.gmra.mxu0 %v1479
      %v1576 = vpop.f32.mrf.mxu0
      %v1577 = vadd.f32 0.0, %v1576
      %v1578 = vpop.f32.mrf.mxu0
      %v1579 = vpop.f32.mrf.mxu0
      %v1580 = vadd.f32 0.0, %v1579
      %v1581 = vpop.f32.mrf.mxu0
      %1582 = vmatprep.mubr.bf16.mxu0 0
      %1583 = vmatmul.mubr.bf16.gmra.mxu0 %v1482
      %v1584 = vpop.f32.mrf.mxu0
      %v1585 = vadd.f32 0.0, %v1584
      %v1586 = vpop.f32.mrf.mxu0
      %v1587 = vpop.f32.mrf.mxu0
      %v1588 = vadd.f32 0.0, %v1587
      %v1589 = vpop.f32.mrf.mxu0
      %1590 = vmatprep.mubr.bf16.mxu0 0
      %1591 = vmatmul.mubr.bf16.gmra.mxu0 %v1485
      %v1592 = vpop.f32.mrf.mxu0
      %v1593 = vadd.f32 0.0, %v1592
      %v1594 = vpop.f32.mrf.mxu0
      %v1595 = vpop.f32.mrf.mxu0
      %v1596 = vadd.f32 0.0, %v1595
      %v1597 = vpop.f32.mrf.mxu0
      %1598 = vmatprep.mubr.bf16.mxu0 0
      %1599 = vmatmul.mubr.bf16.gmra.mxu0 %v1488
      %v1600 = vpop.f32.mrf.mxu0
      %v1601 = vadd.f32 0.0, %v1600
      %v1602 = vpop.f32.mrf.mxu0
      %v1603 = vpop.f32.mrf.mxu0
      %v1604 = vadd.f32 0.0, %v1603
      %v1605 = vpop.f32.mrf.mxu0
      %1606 = vmatprep.mubr.bf16.mxu0 0
      %1607 = vmatmul.mubr.bf16.gmra.mxu0 %v1491
      %v1608 = vpop.f32.mrf.mxu0
      %v1609 = vadd.f32 0.0, %v1608
      %v1610 = vpop.f32.mrf.mxu0
      %v1611 = vpop.f32.mrf.mxu0
      %v1612 = vadd.f32 0.0, %v1611
      %v1613 = vpop.f32.mrf.mxu0
      %1614 = vmatprep.mubr.bf16.mxu0 0
      %1615 = vmatmul.mubr.bf16.gmra.mxu0 %v1494
      %v1616 = vpop.f32.mrf.mxu0
      %v1617 = vadd.f32 0.0, %v1616
      %v1618 = vpop.f32.mrf.mxu0
      %v1619 = vpop.f32.mrf.mxu0
      %v1620 = vadd.f32 0.0, %v1619
      %v1621 = vpop.f32.mrf.mxu0
      %1622 = vmatprep.mubr.bf16.mxu0 0
      %1623 = vmatmul.mubr.bf16.gmra.mxu0 %v1497
      %v1624 = vpop.f32.mrf.mxu0
      %v1625 = vadd.f32 0.0, %v1624
      %v1626 = vpop.f32.mrf.mxu0
      %v1627 = vpop.f32.mrf.mxu0
      %v1628 = vadd.f32 0.0, %v1627
      %v1629 = vpop.f32.mrf.mxu0
      %1630 = vmatprep.mubr.bf16.mxu0 0
      %1631 = vmatmul.mubr.bf16.gmra.mxu0 %v1500
      %v1632 = vpop.f32.mrf.mxu0
      %v1633 = vpop.f32.mrf.mxu0
      %v1634 = vpop.f32.mrf.mxu0
      %v1635 = vpop.f32.mrf.mxu0
      %1636 = vdwg.mxu0
      %v1637 = vadd.f32 %v1307, %v1537
      %v1638 = vadd.f32 %v1310, %v1540
      %v1639 = vadd.f32 %v1315, %v1545
      %v1640 = vadd.f32 %v1318, %v1548
      %v1641 = vadd.f32 %v1323, %v1553
      %v1642 = vadd.f32 %v1326, %v1556
      %v1643 = vadd.f32 %v1331, %v1561
      %v1644 = vadd.f32 %v1334, %v1564
      %v1645 = vadd.f32 %v1339, %v1569
      %v1646 = vadd.f32 %v1342, %v1572
      %v1647 = vadd.f32 %v1347, %v1577
      %v1648 = vadd.f32 %v1350, %v1580
      %v1649 = vadd.f32 %v1355, %v1585
      %v1650 = vadd.f32 %v1358, %v1588
      %v1651 = vadd.f32 %v1363, %v1593
      %v1652 = vadd.f32 %v1366, %v1596
      %v1653 = vadd.f32 %v1371, %v1601
      %v1654 = vadd.f32 %v1374, %v1604
      %v1655 = vadd.f32 %v1379, %v1609
      %v1656 = vadd.f32 %v1382, %v1612
      %v1657 = vadd.f32 %v1387, %v1617
      %v1658 = vadd.f32 %v1390, %v1620
      %v1659 = vadd.f32 %v1395, %v1625
      %v1660 = vadd.f32 %v1398, %v1628
      %vm1685 = vcmask 1046528
      %v1686 = vrot.slane %v1637, 1
      %v1687 = vrot.slane %v1638, 1
      %v1688 = vsel %vm1685, %v1686, %v1687
      %v1689 = vrot.slane %v1639, 1
      %v1690 = vsel %vm1685, %v1687, %v1689
      %v1691 = vrot.slane %v1640, 1
      %v1692 = vrot.slane %v1641, 1
      %v1693 = vsel %vm1685, %v1691, %v1692
      %v1694 = vrot.slane %v1642, 1
      %v1695 = vsel %vm1685, %v1692, %v1694
      %v1696 = vrot.slane %v1643, 1
      %v1697 = vrot.slane %v1644, 1
      %v1698 = vsel %vm1685, %v1696, %v1697
      %v1699 = vrot.slane %v1645, 1
      %v1700 = vsel %vm1685, %v1697, %v1699
      %v1701 = vrot.slane %v1646, 1
      %v1702 = vrot.slane %v1647, 1
      %v1703 = vsel %vm1685, %v1701, %v1702
      %v1704 = vrot.slane %v1648, 1
      %v1705 = vsel %vm1685, %v1702, %v1704
      %v1706 = vrot.slane %v1649, 1
      %v1707 = vrot.slane %v1650, 1
      %v1708 = vsel %vm1685, %v1706, %v1707
      %v1709 = vrot.slane %v1651, 1
      %v1710 = vsel %vm1685, %v1707, %v1709
      %v1711 = vrot.slane %v1652, 1
      %v1712 = vrot.slane %v1653, 1
      %v1713 = vsel %vm1685, %v1711, %v1712
      %v1714 = vrot.slane %v1654, 1
      %v1715 = vsel %vm1685, %v1712, %v1714
      %v1716 = vrot.slane %v1655, 1
      %v1717 = vrot.slane %v1656, 1
      %v1718 = vsel %vm1685, %v1716, %v1717
      %v1719 = vrot.slane %v1657, 1
      %v1720 = vsel %vm1685, %v1717, %v1719
      %v1721 = vrot.slane %v1658, 1
      %v1722 = vrot.slane %v1659, 1
      %v1723 = vsel %vm1685, %v1721, %v1722
      %v1724 = vrot.slane %v1660, 1
      %v1725 = vsel %vm1685, %v1722, %v1724
      %1726 = vrot.lane.b32.xlu0 %v1688, 120
      %v1727 = vpop.permute.xlu0 %1726
      %1728 = vrot.lane.b32.xlu0 %v1690, 120
      %v1729 = vpop.permute.xlu0 %1728
      %1730 = vrot.lane.b32.xlu0 %v1693, 120
      %v1731 = vpop.permute.xlu0 %1730
      %1732 = vrot.lane.b32.xlu0 %v1695, 120
      %v1733 = vpop.permute.xlu0 %1732
      %1734 = vrot.lane.b32.xlu0 %v1698, 120
      %v1735 = vpop.permute.xlu0 %1734
      %1736 = vrot.lane.b32.xlu0 %v1700, 120
      %v1737 = vpop.permute.xlu0 %1736
      %1738 = vrot.lane.b32.xlu0 %v1703, 120
      %v1739 = vpop.permute.xlu0 %1738
      %1740 = vrot.lane.b32.xlu0 %v1705, 120
      %v1741 = vpop.permute.xlu0 %1740
      %1742 = vrot.lane.b32.xlu0 %v1708, 120
      %v1743 = vpop.permute.xlu0 %1742
      %1744 = vrot.lane.b32.xlu0 %v1710, 120
      %v1745 = vpop.permute.xlu0 %1744
      %1746 = vrot.lane.b32.xlu0 %v1713, 120
      %v1747 = vpop.permute.xlu0 %1746
      %1748 = vrot.lane.b32.xlu0 %v1715, 120
      %v1749 = vpop.permute.xlu0 %1748
      %1750 = vrot.lane.b32.xlu0 %v1718, 120
      %v1751 = vpop.permute.xlu0 %1750
      %1752 = vrot.lane.b32.xlu0 %v1720, 120
      %v1753 = vpop.permute.xlu0 %1752
      %1754 = vrot.lane.b32.xlu0 %v1723, 120
      %v1755 = vpop.permute.xlu0 %1754
      %1756 = vrot.lane.b32.xlu0 %v1725, 120
      %v1757 = vpop.permute.xlu0 %1756
      %v1774 = vadd.f32 %v1637, %v1727
      %v1775 = vadd.f32 %v1638, %v1729
      %v1776 = vadd.f32 %v1640, %v1731
      %v1777 = vadd.f32 %v1641, %v1733
      %v1778 = vadd.f32 %v1643, %v1735
      %v1779 = vadd.f32 %v1644, %v1737
      %v1780 = vadd.f32 %v1646, %v1739
      %v1781 = vadd.f32 %v1647, %v1741
      %v1782 = vadd.f32 %v1649, %v1743
      %v1783 = vadd.f32 %v1650, %v1745
      %v1784 = vadd.f32 %v1652, %v1747
      %v1785 = vadd.f32 %v1653, %v1749
      %v1786 = vadd.f32 %v1655, %v1751
      %v1787 = vadd.f32 %v1656, %v1753
      %v1788 = vadd.f32 %v1658, %v1755
      %v1789 = vadd.f32 %v1659, %v1757
      %vm1790 = vcmask 1045504
      %v1791 = vrot.slane %v1637, 2
      %v1792 = vrot.slane %v1638, 2
      %v1793 = vsel %vm1790, %v1791, %v1792
      %v1794 = vrot.slane %v1639, 2
      %v1795 = vsel %vm1790, %v1792, %v1794
      %v1796 = vrot.slane %v1640, 2
      %v1797 = vrot.slane %v1641, 2
      %v1798 = vsel %vm1790, %v1796, %v1797
      %v1799 = vrot.slane %v1642, 2
      %v1800 = vsel %vm1790, %v1797, %v1799
      %v1801 = vrot.slane %v1643, 2
      %v1802 = vrot.slane %v1644, 2
      %v1803 = vsel %vm1790, %v1801, %v1802
      %v1804 = vrot.slane %v1645, 2
      %v1805 = vsel %vm1790, %v1802, %v1804
      %v1806 = vrot.slane %v1646, 2
      %v1807 = vrot.slane %v1647, 2
      %v1808 = vsel %vm1790, %v1806, %v1807
      %v1809 = vrot.slane %v1648, 2
      %v1810 = vsel %vm1790, %v1807, %v1809
      %v1811 = vrot.slane %v1649, 2
      %v1812 = vrot.slane %v1650, 2
      %v1813 = vsel %vm1790, %v1811, %v1812
      %v1814 = vrot.slane %v1651, 2
      %v1815 = vsel %vm1790, %v1812, %v1814
      %v1816 = vrot.slane %v1652, 2
      %v1817 = vrot.slane %v1653, 2
      %v1818 = vsel %vm1790, %v1816, %v1817
      %v1819 = vrot.slane %v1654, 2
      %v1820 = vsel %vm1790, %v1817, %v1819
      %v1821 = vrot.slane %v1655, 2
      %v1822 = vrot.slane %v1656, 2
      %v1823 = vsel %vm1790, %v1821, %v1822
      %v1824 = vrot.slane %v1657, 2
      %v1825 = vsel %vm1790, %v1822, %v1824
      %v1826 = vrot.slane %v1658, 2
      %v1827 = vrot.slane %v1659, 2
      %v1828 = vsel %vm1790, %v1826, %v1827
      %v1829 = vrot.slane %v1660, 2
      %v1830 = vsel %vm1790, %v1827, %v1829
      %1831 = vrot.lane.b32.xlu0 %v1793, 112
      %v1832 = vpop.permute.xlu0 %1831
      %1833 = vrot.lane.b32.xlu0 %v1795, 112
      %v1834 = vpop.permute.xlu0 %1833
      %1835 = vrot.lane.b32.xlu0 %v1798, 112
      %v1836 = vpop.permute.xlu0 %1835
      %1837 = vrot.lane.b32.xlu0 %v1800, 112
      %v1838 = vpop.permute.xlu0 %1837
      %1839 = vrot.lane.b32.xlu0 %v1803, 112
      %v1840 = vpop.permute.xlu0 %1839
      %1841 = vrot.lane.b32.xlu0 %v1805, 112
      %v1842 = vpop.permute.xlu0 %1841
      %1843 = vrot.lane.b32.xlu0 %v1808, 112
      %v1844 = vpop.permute.xlu0 %1843
      %1845 = vrot.lane.b32.xlu0 %v1810, 112
      %v1846 = vpop.permute.xlu0 %1845
      %1847 = vrot.lane.b32.xlu0 %v1813, 112
      %v1848 = vpop.permute.xlu0 %1847
      %1849 = vrot.lane.b32.xlu0 %v1815, 112
      %v1850 = vpop.permute.xlu0 %1849
      %1851 = vrot.lane.b32.xlu0 %v1818, 112
      %v1852 = vpop.permute.xlu0 %1851
      %1853 = vrot.lane.b32.xlu0 %v1820, 112
      %v1854 = vpop.permute.xlu0 %1853
      %1855 = vrot.lane.b32.xlu0 %v1823, 112
      %v1856 = vpop.permute.xlu0 %1855
      %1857 = vrot.lane.b32.xlu0 %v1825, 112
      %v1858 = vpop.permute.xlu0 %1857
      %1859 = vrot.lane.b32.xlu0 %v1828, 112
      %v1860 = vpop.permute.xlu0 %1859
      %1861 = vrot.lane.b32.xlu0 %v1830, 112
      %v1862 = vpop.permute.xlu0 %1861
      %v1879 = vadd.f32 %v1774, %v1832
      %v1880 = vadd.f32 %v1775, %v1834
      %v1881 = vadd.f32 %v1776, %v1836
      %v1882 = vadd.f32 %v1777, %v1838
      %v1883 = vadd.f32 %v1778, %v1840
      %v1884 = vadd.f32 %v1779, %v1842
      %v1885 = vadd.f32 %v1780, %v1844
      %v1886 = vadd.f32 %v1781, %v1846
      %v1887 = vadd.f32 %v1782, %v1848
      %v1888 = vadd.f32 %v1783, %v1850
      %v1889 = vadd.f32 %v1784, %v1852
      %v1890 = vadd.f32 %v1785, %v1854
      %v1891 = vadd.f32 %v1786, %v1856
      %v1892 = vadd.f32 %v1787, %v1858
      %v1893 = vadd.f32 %v1788, %v1860
      %v1894 = vadd.f32 %v1789, %v1862
      %v1895 = vcombine.low %v1879, %v1883
      %v1896 = vcombine.high %v1879, %v1883
      %v1898 = vunpack.c.l.s4 1983009808
      %v1899 = vunpack.c.0.s8 %v1898
      %v1900 = vlaneseq
      %v1901 = vshrl.u32 %v1900, 7
      %v1902 = vsub.s32 %v1899, %v1901
      %v1903 = vrot.slane %v1895, %v1902
      %v1905 = vunpack.c.l.s4 1983009808
      %v1906 = vunpack.c.0.s8 %v1905
      %v1907 = vlaneseq
      %v1908 = vshrl.u32 %v1907, 7
      %v1909 = vsub.s32 %v1906, %v1908
      %v1910 = vrot.slane %v1896, %v1909
      %v1911 = vcombine.low %v1881, %v1885
      %v1912 = vcombine.high %v1881, %v1885
      %v1914 = vunpack.c.l.s4 1983009808
      %v1915 = vunpack.c.0.s8 %v1914
      %v1916 = vlaneseq
      %v1917 = vshrl.u32 %v1916, 7
      %v1918 = vsub.s32 %v1915, %v1917
      %v1919 = vrot.slane %v1911, %v1918
      %v1921 = vunpack.c.l.s4 1983009808
      %v1922 = vunpack.c.0.s8 %v1921
      %v1923 = vlaneseq
      %v1924 = vshrl.u32 %v1923, 7
      %v1925 = vsub.s32 %v1922, %v1924
      %v1926 = vrot.slane %v1912, %v1925
      %v1927 = vcombine.low %v1887, %v1891
      %v1928 = vcombine.high %v1887, %v1891
      %v1930 = vunpack.c.l.s4 1983009808
      %v1931 = vunpack.c.0.s8 %v1930
      %v1932 = vlaneseq
      %v1933 = vshrl.u32 %v1932, 7
      %v1934 = vsub.s32 %v1931, %v1933
      %v1935 = vrot.slane %v1927, %v1934
      %v1937 = vunpack.c.l.s4 1983009808
      %v1938 = vunpack.c.0.s8 %v1937
      %v1939 = vlaneseq
      %v1940 = vshrl.u32 %v1939, 7
      %v1941 = vsub.s32 %v1938, %v1940
      %v1942 = vrot.slane %v1928, %v1941
      %v1943 = vcombine.low %v1889, %v1893
      %v1944 = vcombine.high %v1889, %v1893
      %v1946 = vunpack.c.l.s4 1983009808
      %v1947 = vunpack.c.0.s8 %v1946
      %v1948 = vlaneseq
      %v1949 = vshrl.u32 %v1948, 7
      %v1950 = vsub.s32 %v1947, %v1949
      %v1951 = vrot.slane %v1943, %v1950
      %v1953 = vunpack.c.l.s4 1983009808
      %v1954 = vunpack.c.0.s8 %v1953
      %v1955 = vlaneseq
      %v1956 = vshrl.u32 %v1955, 7
      %v1957 = vsub.s32 %v1954, %v1956
      %v1958 = vrot.slane %v1944, %v1957
      %v1959 = vcombine.low %v1903, %v1919
      %v1960 = vcombine.high %v1903, %v1919
      %v1962 = vunpack.c.l.s4 1934713408
      %v1963 = vunpack.c.0.s8 %v1962
      %v1964 = vlaneseq
      %v1965 = vshrl.u32 %v1964, 7
      %v1966 = vsub.s32 %v1963, %v1965
      %v1967 = vrot.slane %v1959, %v1966
      %v1969 = vunpack.c.l.s4 1934713408
      %v1970 = vunpack.c.0.s8 %v1969
      %v1971 = vlaneseq
      %v1972 = vshrl.u32 %v1971, 7
      %v1973 = vsub.s32 %v1970, %v1972
      %v1974 = vrot.slane %v1960, %v1973
      %v1975 = vcombine.low %v1910, %v1926
      %v1976 = vcombine.high %v1910, %v1926
      %v1978 = vunpack.c.l.s4 1934713408
      %v1979 = vunpack.c.0.s8 %v1978
      %v1980 = vlaneseq
      %v1981 = vshrl.u32 %v1980, 7
      %v1982 = vsub.s32 %v1979, %v1981
      %v1983 = vrot.slane %v1975, %v1982
      %v1985 = vunpack.c.l.s4 1934713408
      %v1986 = vunpack.c.0.s8 %v1985
      %v1987 = vlaneseq
      %v1988 = vshrl.u32 %v1987, 7
      %v1989 = vsub.s32 %v1986, %v1988
      %v1990 = vrot.slane %v1976, %v1989
      %v1991 = vcombine.low %v1935, %v1951
      %v1992 = vcombine.high %v1935, %v1951
      %v1994 = vunpack.c.l.s4 1934713408
      %v1995 = vunpack.c.0.s8 %v1994
      %v1996 = vlaneseq
      %v1997 = vshrl.u32 %v1996, 7
      %v1998 = vsub.s32 %v1995, %v1997
      %v1999 = vrot.slane %v1991, %v1998
      %v2001 = vunpack.c.l.s4 1934713408
      %v2002 = vunpack.c.0.s8 %v2001
      %v2003 = vlaneseq
      %v2004 = vshrl.u32 %v2003, 7
      %v2005 = vsub.s32 %v2002, %v2004
      %v2006 = vrot.slane %v1992, %v2005
      %v2007 = vcombine.low %v1942, %v1958
      %v2008 = vcombine.high %v1942, %v1958
      %v2010 = vunpack.c.l.s4 1934713408
      %v2011 = vunpack.c.0.s8 %v2010
      %v2012 = vlaneseq
      %v2013 = vshrl.u32 %v2012, 7
      %v2014 = vsub.s32 %v2011, %v2013
      %v2015 = vrot.slane %v2007, %v2014
      %v2017 = vunpack.c.l.s4 1934713408
      %v2018 = vunpack.c.0.s8 %v2017
      %v2019 = vlaneseq
      %v2020 = vshrl.u32 %v2019, 7
      %v2021 = vsub.s32 %v2018, %v2020
      %v2022 = vrot.slane %v2008, %v2021
      %v2023 = vcombine.low %v1967, %v1999
      %v2024 = vcombine.high %v1967, %v1999
      %v2025 = vcombine.low %v1974, %v2006
      %v2026 = vcombine.high %v1974, %v2006
      %v2027 = vcombine.low %v1983, %v2015
      %v2028 = vcombine.high %v1983, %v2015
      %v2029 = vcombine.low %v1990, %v2022
      %v2030 = vcombine.high %v1990, %v2022
      %v2031 = vcombine.low %v1880, %v1884
      %v2032 = vcombine.high %v1880, %v1884
      %v2034 = vunpack.c.l.s4 1983009808
      %v2035 = vunpack.c.0.s8 %v2034
      %v2036 = vlaneseq
      %v2037 = vshrl.u32 %v2036, 7
      %v2038 = vsub.s32 %v2035, %v2037
      %v2039 = vrot.slane %v2031, %v2038
      %v2041 = vunpack.c.l.s4 1983009808
      %v2042 = vunpack.c.0.s8 %v2041
      %v2043 = vlaneseq
      %v2044 = vshrl.u32 %v2043, 7
      %v2045 = vsub.s32 %v2042, %v2044
      %v2046 = vrot.slane %v2032, %v2045
      %v2047 = vcombine.low %v1882, %v1886
      %v2048 = vcombine.high %v1882, %v1886
      %v2050 = vunpack.c.l.s4 1983009808
      %v2051 = vunpack.c.0.s8 %v2050
      %v2052 = vlaneseq
      %v2053 = vshrl.u32 %v2052, 7
      %v2054 = vsub.s32 %v2051, %v2053
      %v2055 = vrot.slane %v2047, %v2054
      %v2057 = vunpack.c.l.s4 1983009808
      %v2058 = vunpack.c.0.s8 %v2057
      %v2059 = vlaneseq
      %v2060 = vshrl.u32 %v2059, 7
      %v2061 = vsub.s32 %v2058, %v2060
      %v2062 = vrot.slane %v2048, %v2061
      %v2063 = vcombine.low %v1888, %v1892
      %v2064 = vcombine.high %v1888, %v1892
      %v2066 = vunpack.c.l.s4 1983009808
      %v2067 = vunpack.c.0.s8 %v2066
      %v2068 = vlaneseq
      %v2069 = vshrl.u32 %v2068, 7
      %v2070 = vsub.s32 %v2067, %v2069
      %v2071 = vrot.slane %v2063, %v2070
      %v2073 = vunpack.c.l.s4 1983009808
      %v2074 = vunpack.c.0.s8 %v2073
      %v2075 = vlaneseq
      %v2076 = vshrl.u32 %v2075, 7
      %v2077 = vsub.s32 %v2074, %v2076
      %v2078 = vrot.slane %v2064, %v2077
      %v2079 = vcombine.low %v1890, %v1894
      %v2080 = vcombine.high %v1890, %v1894
      %v2082 = vunpack.c.l.s4 1983009808
      %v2083 = vunpack.c.0.s8 %v2082
      %v2084 = vlaneseq
      %v2085 = vshrl.u32 %v2084, 7
      %v2086 = vsub.s32 %v2083, %v2085
      %v2087 = vrot.slane %v2079, %v2086
      %v2089 = vunpack.c.l.s4 1983009808
      %v2090 = vunpack.c.0.s8 %v2089
      %v2091 = vlaneseq
      %v2092 = vshrl.u32 %v2091, 7
      %v2093 = vsub.s32 %v2090, %v2092
      %v2094 = vrot.slane %v2080, %v2093
      %v2095 = vcombine.low %v2039, %v2055
      %v2096 = vcombine.high %v2039, %v2055
      %v2098 = vunpack.c.l.s4 1934713408
      %v2099 = vunpack.c.0.s8 %v2098
      %v2100 = vlaneseq
      %v2101 = vshrl.u32 %v2100, 7
      %v2102 = vsub.s32 %v2099, %v2101
      %v2103 = vrot.slane %v2095, %v2102
      %v2105 = vunpack.c.l.s4 1934713408
      %v2106 = vunpack.c.0.s8 %v2105
      %v2107 = vlaneseq
      %v2108 = vshrl.u32 %v2107, 7
      %v2109 = vsub.s32 %v2106, %v2108
      %v2110 = vrot.slane %v2096, %v2109
      %v2111 = vcombine.low %v2046, %v2062
      %v2112 = vcombine.high %v2046, %v2062
      %v2114 = vunpack.c.l.s4 1934713408
      %v2115 = vunpack.c.0.s8 %v2114
      %v2116 = vlaneseq
      %v2117 = vshrl.u32 %v2116, 7
      %v2118 = vsub.s32 %v2115, %v2117
      %v2119 = vrot.slane %v2111, %v2118
      %v2121 = vunpack.c.l.s4 1934713408
      %v2122 = vunpack.c.0.s8 %v2121
      %v2123 = vlaneseq
      %v2124 = vshrl.u32 %v2123, 7
      %v2125 = vsub.s32 %v2122, %v2124
      %v2126 = vrot.slane %v2112, %v2125
      %v2127 = vcombine.low %v2071, %v2087
      %v2128 = vcombine.high %v2071, %v2087
      %v2130 = vunpack.c.l.s4 1934713408
      %v2131 = vunpack.c.0.s8 %v2130
      %v2132 = vlaneseq
      %v2133 = vshrl.u32 %v2132, 7
      %v2134 = vsub.s32 %v2131, %v2133
      %v2135 = vrot.slane %v2127, %v2134
      %v2137 = vunpack.c.l.s4 1934713408
      %v2138 = vunpack.c.0.s8 %v2137
      %v2139 = vlaneseq
      %v2140 = vshrl.u32 %v2139, 7
      %v2141 = vsub.s32 %v2138, %v2140
      %v2142 = vrot.slane %v2128, %v2141
      %v2143 = vcombine.low %v2078, %v2094
      %v2144 = vcombine.high %v2078, %v2094
      %v2146 = vunpack.c.l.s4 1934713408
      %v2147 = vunpack.c.0.s8 %v2146
      %v2148 = vlaneseq
      %v2149 = vshrl.u32 %v2148, 7
      %v2150 = vsub.s32 %v2147, %v2149
      %v2151 = vrot.slane %v2143, %v2150
      %v2153 = vunpack.c.l.s4 1934713408
      %v2154 = vunpack.c.0.s8 %v2153
      %v2155 = vlaneseq
      %v2156 = vshrl.u32 %v2155, 7
      %v2157 = vsub.s32 %v2154, %v2156
      %v2158 = vrot.slane %v2144, %v2157
      %v2159 = vcombine.low %v2103, %v2135
      %v2160 = vcombine.high %v2103, %v2135
      %v2161 = vcombine.low %v2110, %v2142
      %v2162 = vcombine.high %v2110, %v2142
      %v2163 = vcombine.low %v2119, %v2151
      %v2164 = vcombine.high %v2119, %v2151
      %v2165 = vcombine.low %v2126, %v2158
      %v2166 = vcombine.high %v2126, %v2158
      %2168 = vrot.lane.b32.xlu0 %v2024, 8
      %v2169 = vpop.permute.xlu0 %2168
      %2172 = vrot.lane.b32.xlu0 %v2025, 16
      %v2173 = vpop.permute.xlu0 %2172
      %2176 = vrot.lane.b32.xlu0 %v2026, 24
      %v2177 = vpop.permute.xlu0 %2176
      %2180 = vrot.lane.b32.xlu0 %v2027, 32
      %v2181 = vpop.permute.xlu0 %2180
      %2184 = vrot.lane.b32.xlu0 %v2028, 40
      %v2185 = vpop.permute.xlu0 %2184
      %2188 = vrot.lane.b32.xlu0 %v2029, 48
      %v2189 = vpop.permute.xlu0 %2188
      %2192 = vrot.lane.b32.xlu0 %v2030, 56
      %v2193 = vpop.permute.xlu0 %2192
      %2196 = vrot.lane.b32.xlu0 %v2159, 64
      %v2197 = vpop.permute.xlu0 %2196
      %2200 = vrot.lane.b32.xlu0 %v2160, 72
      %v2201 = vpop.permute.xlu0 %2200
      %2204 = vrot.lane.b32.xlu0 %v2161, 80
      %v2205 = vpop.permute.xlu0 %2204
      %2208 = vrot.lane.b32.xlu0 %v2162, 88
      %v2209 = vpop.permute.xlu0 %2208
      %2212 = vrot.lane.b32.xlu0 %v2163, 96
      %v2213 = vpop.permute.xlu0 %2212
      %2216 = vrot.lane.b32.xlu0 %v2164, 104
      %v2217 = vpop.permute.xlu0 %2216
      %2220 = vrot.lane.b32.xlu0 %v2165, 112
      %v2221 = vpop.permute.xlu0 %2220
      %2224 = vrot.lane.b32.xlu0 %v2166, 120
      %v2225 = vpop.permute.xlu0 %2224
      %vm2227 = vcmask 64512
      %v2228 = vsel %vm2227, %v2023, %v2169
      %vm2229 = vcmask 130048
      %v2230 = vsel %vm2229, %v2228, %v2173
      %vm2231 = vcmask 195584
      %v2232 = vsel %vm2231, %v2230, %v2177
      %v2233 = vsel %vm890, %v2232, %v2181
      %vm2234 = vcmask 326656
      %v2235 = vsel %vm2234, %v2233, %v2185
      %vm2236 = vcmask 392192
      %v2237 = vsel %vm2236, %v2235, %v2189
      %vm2238 = vcmask 457728
      %v2239 = vsel %vm2238, %v2237, %v2193
      %vm2240 = vcmask 523264
      %v2241 = vsel %vm2240, %v2239, %v2197
      %vm2242 = vcmask 588800
      %v2243 = vsel %vm2242, %v2241, %v2201
      %vm2244 = vcmask 654336
      %v2245 = vsel %vm2244, %v2243, %v2205
      %vm2246 = vcmask 719872
      %v2247 = vsel %vm2246, %v2245, %v2209
      %vm2248 = vcmask 785408
      %v2249 = vsel %vm2248, %v2247, %v2213
      %vm2250 = vcmask 850944
      %v2251 = vsel %vm2250, %v2249, %v2217
      %vm2252 = vcmask 916480
      %v2253 = vsel %vm2252, %v2251, %v2221
      %vm2254 = vcmask 982016
      %v2255 = vsel %vm2254, %v2253, %v2225
      %2256 = vst [vmem:[%s495] sm:$0xff] %v2255
      %p2257 = scmp.lt.s32.totalorder %s24, 1
      %s2258 = scalar_select %p2257, %s24, 1
      %p2259 = scmp.lt.s32.totalorder %s25, 1
      %s2260 = scalar_select %p2259, %s25, 1
      %s2261 = smul.addr %s2258, 2
      %s2262 = sadd.s32 %s2260, %s2261
      %s2263 = smul.addr %s2262, 8
      %s2264 = scalar_lea.vmem %s9, %s2263
      // Predicated region
      $region65: #{dense_layer_forward_nhwc.1} parent=55 // pred_check
        %p2265 = pneg %p278
      $region66: #{dense_layer_forward_nhwc.1} parent=55 // pred_check_branch
        %2267 = sbr.rel (%p2265) target = $region68
      $region67: #{dense_layer_forward_nhwc.1} parent=55 // pred_region
        _
      $region68: #{dense_layer_forward_nhwc.1} parent=55 // pred_fallthru
        _
    $region56: #{dense_layer_forward_nhwc.1} parent=5 // pred_fallthru
      _
    %p2268 = scmp.le.s32.totalorder 2, %s15
    // Predicated region
    $region69: #{dense_layer_forward_nhwc.1} parent=5 // pred_check
      %p2269 = pneg %p2268
    $region70: #{dense_layer_forward_nhwc.1} parent=5 // pred_check_branch
      %2271 = sbr.rel (%p2269) target = $region72
    $region71: #{dense_layer_forward_nhwc.1} parent=5 // pred_region
      %s2272 = ssub.s32 %s15, 2
      // Predicated region
      $region73: #{dense_layer_forward_nhwc.1} parent=71 // pred_check
        %p2273 = pneg %p284
      $region74: #{dense_layer_forward_nhwc.1} parent=71 // pred_check_branch
        %2275 = sbr.rel (%p2273) target = $region76
      $region75: #{dense_layer_forward_nhwc.1} parent=71 // pred_region
        %p2276 = scmp.lt.s32.totalorder %s26, 1
        %s2277 = scalar_select %p2276, %s26, 1
        %p2278 = scmp.lt.s32.totalorder %s27, 1
        %s2279 = scalar_select %p2278, %s27, 1
        %s2280 = smul.addr %s2277, 2
        %s2281 = sadd.s32 %s2279, %s2280
        %s2282 = smul.addr %s2281, 8
        %s2283 = scalar_lea.vmem %s9, %s2282
      $region76: #{dense_layer_forward_nhwc.1} parent=71 // pred_fallthru
        _
    $region72: #{dense_layer_forward_nhwc.1} parent=5 // pred_fallthru
      _
  $region6: #{dense_layer_forward_nhwc.1} parent=0 // loop_footer
    %s19 = sadd.s32 1, %s15
  $region7: #{dense_layer_forward_nhwc.1} parent=0 // loop_footer_branch
    %14 = sbr.rel target = $region3
  $region8: #{dense_layer_forward_nhwc.1} parent=0 // loop_exit
    _

</llo_original>
